<compile_context>
chip_gen: v5e
topology: v5e:2x2
jax: 0.10.0
libtpu: 0.0.40
codegen_flags: <defaults>
</compile_context>

<pallas_src>
import math
from functools import partial

import jax
import jax.numpy as jnp
from jax.experimental import pallas as pl
from jax.experimental.pallas import tpu as pltpu

F_IN = 39        # true input feature count (matches nn.Linear(39, 512))
F_PAD = 128      # zero-padded, lane-friendly feature dim (col F_IN = 1.0 bias)
HIDDEN = 512
MAX_TILE = 512   # rows per grid step for large batches
ROW_ALIGN = 16   # bf16 input tiles pack (16, 128)


def _cdiv(a, b):
    return -(-a // b)


def _round_up(x, m):
    return _cdiv(x, m) * m


def _device_kind():
    try:
        return jax.devices()[0].device_kind.lower()
    except Exception:
        return ""


def _num_tensorcores():
    # v7x has 2 TensorCores per chip; v5e/v6e have 1.
    return 2 if "v7" in _device_kind() else 1


def _vpu_has_bf16():
    # bf16 VALU exists on v6e/v7x; v5e keeps the f32 ReLU path.
    kind = _device_kind()
    return ("v6" in kind) or ("v7" in kind)


def critic_net_kernel(x_ref, w1_ref, w2_ref, b2_ref, w3_ref, b3_ref,
                      wc_ref, bc_ref, out_ref, *, relu_in_bf16):
    """relu(relu(relu([x,1] @ W1') @ W2 + b2) @ W3 + b3) . wc + bc."""

    def relu_to_bf16(h):
        # relu(cast(h)) == cast(relu(h)); pick the ordering that keeps the
        # VALU op packed on chips with a bf16 VPU.
        if relu_in_bf16:
            return jnp.maximum(h.astype(jnp.bfloat16), 0.0)
        return jnp.maximum(h, 0.0).astype(jnp.bfloat16)

    # Layer 1: b1 is folded into W1 row F_IN (x column F_IN carries 1.0).
    h = jnp.dot(x_ref[...], w1_ref[...], preferred_element_type=jnp.float32)
    h = relu_to_bf16(h)
    h = jnp.dot(h, w2_ref[...], preferred_element_type=jnp.float32) + b2_ref[...]
    h = relu_to_bf16(h)
    h = jnp.dot(h, w3_ref[...], preferred_element_type=jnp.float32) + b3_ref[...]
    h = jnp.maximum(h, 0.0)                      # f32, feeds the VPU head
    # 512 -> 1 head: VPU multiply + cross-lane reduce (wc is a [1, 512] row).
    out_ref[...] = (jnp.sum(h * wc_ref[...], axis=-1, keepdims=True)
                    + bc_ref[0, 0])


def prepare_kernel_params(params):
    """f32 'PyTorch-layout' params -> kernel params (padded / bf16, b1 folded)."""
    w1, b1, w2, b2, w3, b3, wc, bc = params
    w1p = jnp.zeros((F_PAD, HIDDEN), jnp.float32)
    w1p = w1p.at[:F_IN, :].set(w1)
    w1p = w1p.at[F_IN, :].set(b1.reshape(HIDDEN))   # folded bias row
    return (
        w1p.astype(jnp.bfloat16),
        w2.astype(jnp.bfloat16), b2,
        w3.astype(jnp.bfloat16), b3,
        wc.reshape(1, HIDDEN).astype(jnp.float32),  # [512,1] -> [1,512] row
        bc.reshape(1, 1).astype(jnp.float32),       # SMEM scalar
    )


def _pick_tiling(B):
    """Rows per tile + padded batch: few grid steps, little padding waste,
    and >=2 steps on v7x so both TensorCores get work."""
    n = _cdiv(B, MAX_TILE)
    n_cores = _num_tensorcores()
    if B >= 2 * ROW_ALIGN * n_cores:
        n = max(n, n_cores)
    n = min(n, max(_cdiv(B, ROW_ALIGN), 1))
    tm = _round_up(_cdiv(B, n), ROW_ALIGN)
    return tm, n * tm


def critic_net_forward(state, kernel_params):
    """state: [B, 39] float32 -> [B, 1] float32."""
    w1, w2, b2, w3, b3, wc, bc = kernel_params
    B = state.shape[0]
    tm, padded_b = _pick_tiling(B)

    # Pad 39 -> 128 features and pre-cast to bf16 once in the wrapper;
    # column F_IN carries the constant 1.0 that picks up the folded b1.
    x = jnp.zeros((padded_b, F_PAD), jnp.bfloat16)
    x = x.at[:B, :F_IN].set(state.astype(jnp.bfloat16))
    x = x.at[:, F_IN].set(1.0)

    const = lambda i: (0, 0)
    kernel = partial(critic_net_kernel, relu_in_bf16=_vpu_has_bf16())
    # TODO(synk): mark constant weight specs pipeline_mode=pl.Buffered(1) and
    # add cross-pallas_call weight prefetch for the tiny-batch (B<=64) path.
    out = pl.pallas_call(
        kernel,
        out_shape=jax.ShapeDtypeStruct((padded_b, 1), jnp.float32),
        grid=(padded_b // tm,),
        in_specs=[
            pl.BlockSpec((tm, F_PAD), lambda i: (i, 0)),      # x tile (bf16)
            pl.BlockSpec((F_PAD, HIDDEN), const),             # W1 (+b1 row)
            pl.BlockSpec((HIDDEN, HIDDEN), const),            # W2 (resident)
            pl.BlockSpec((1, HIDDEN), const),                 # b2
            pl.BlockSpec((HIDDEN, HIDDEN), const),            # W3
            pl.BlockSpec((1, HIDDEN), const),                 # b3
            pl.BlockSpec((1, HIDDEN), const),                 # wc row
            pl.BlockSpec(memory_space=pltpu.SMEM),            # bc scalar
        ],
        out_specs=pl.BlockSpec((tm, 1), lambda i: (i, 0)),
        compiler_params=pltpu.CompilerParams(
            dimension_semantics=("parallel",)),
    )(x, w1, w2, b2, w3, b3, wc, bc)
    return out[:B]


def _linear_init(key, fan_in, fan_out):
    """PyTorch-style nn.Linear init, W stored as [in, out], bias as [1, out]."""
    kw, kb = jax.random.split(key)
    bound = 1.0 / math.sqrt(fan_in)
    w = jax.random.uniform(kw, (fan_in, fan_out), jnp.float32, -bound, bound)
    b = jax.random.uniform(kb, (1, fan_out), jnp.float32, -bound, bound)
    return w, b


def make_params(key):
    k1, k2, k3, k4 = jax.random.split(key, 4)
    w1, b1 = _linear_init(k1, F_IN, HIDDEN)     # SharedNetwork.fc1
    w2, b2 = _linear_init(k2, HIDDEN, HIDDEN)   # SharedNetwork.fc2
    w3, b3 = _linear_init(k3, HIDDEN, HIDDEN)   # SharedNetwork.fc3
    wc, bc = _linear_init(k4, HIDDEN, 1)        # CriticNet.critic
    return (w1, b1, w2, b2, w3, b3, wc, bc)


def critic_net_reference_f32(state, params):
    """Pure-JAX f32 reference mirroring the PyTorch forward."""
    w1, b1, w2, b2, w3, b3, wc, bc = params
    x = jnp.maximum(state @ w1 + b1, 0.0)
    x = jnp.maximum(x @ w2 + b2, 0.0)
    x = jnp.maximum(x @ w3 + b3, 0.0)
    return x @ wc + bc


def critic_net_reference_bf16(state, params):
    """Reference with the kernel's bf16-in / f32-accumulate scheme; b1 is
    rounded to bf16 since the kernel folds it into the bf16 W1."""
    w1, b1, w2, b2, w3, b3, wc, bc = params
    bf = jnp.bfloat16
    b1f = b1.astype(bf).astype(jnp.float32)
    x = jnp.maximum(
        jnp.dot(state.astype(bf), w1.astype(bf),
                preferred_element_type=jnp.float32) + b1f, 0.0)
    x = jnp.maximum(
        jnp.dot(x.astype(bf), w2.astype(bf),
                preferred_element_type=jnp.float32) + b2, 0.0)
    x = jnp.maximum(
        jnp.dot(x.astype(bf), w3.astype(bf),
                preferred_element_type=jnp.float32) + b3, 0.0)
    return x @ wc + bc


if __name__ == "__main__":
    key = jax.random.PRNGKey(0)
    k_params, k_state = jax.random.split(key)

    params = make_params(k_params)
    kernel_params = prepare_kernel_params(params)
    state = jax.random.normal(k_state, (8, F_IN), dtype=jnp.float32)  # batch=8

    out = jax.block_until_ready(critic_net_forward(state, kernel_params))
    assert out.shape == (8, 1)

    ref_bf16 = critic_net_reference_bf16(state, params)
    ref_f32 = critic_net_reference_f32(state, params)
    assert jnp.allclose(out, ref_bf16, atol=1e-3, rtol=1e-3), \
        f"max abs diff vs bf16 ref: {jnp.max(jnp.abs(out - ref_bf16))}"
    assert jnp.allclose(out, ref_f32, atol=3e-2, rtol=3e-2), \
        f"max abs diff vs f32 ref: {jnp.max(jnp.abs(out - ref_f32))}"

    print("KERNEL_OK")
</pallas_src>

<mosaic_0001>
module attributes {stable_mosaic.version = 11 : i64} {
  func.func @critic_net_kernel(%arg0: i32, %arg1: memref<16x128xbf16, #tpu.memory_space<vmem>>, %arg2: memref<128x512xbf16, #tpu.memory_space<vmem>>, %arg3: memref<512x512xbf16, #tpu.memory_space<vmem>>, %arg4: memref<1x512xf32, #tpu.memory_space<vmem>>, %arg5: memref<512x512xbf16, #tpu.memory_space<vmem>>, %arg6: memref<1x512xf32, #tpu.memory_space<vmem>>, %arg7: memref<1x512xf32, #tpu.memory_space<vmem>>, %arg8: memref<1x1xf32, #tpu.memory_space<smem>>, %arg9: memref<16x1xf32, #tpu.memory_space<vmem>>) attributes {dimension_semantics = [#tpu.dimension_semantics<parallel>], iteration_bounds = array<i64: 1>, scalar_prefetch = 0 : i64, scratch_operands = 0 : i64, tpu.core_type = #tpu.core_type<tc>, window_params = [{transform_indices = @transform_0, window_bounds = array<i64: 16, 128>}, {pipeline_mode = #tpu.pipeline_mode<synchronous>, transform_indices = @transform_1, window_bounds = array<i64: 128, 512>}, {pipeline_mode = #tpu.pipeline_mode<synchronous>, transform_indices = @transform_2, window_bounds = array<i64: 512, 512>}, {pipeline_mode = #tpu.pipeline_mode<synchronous>, transform_indices = @transform_3, window_bounds = array<i64: 1, 512>}, {pipeline_mode = #tpu.pipeline_mode<synchronous>, transform_indices = @transform_4, window_bounds = array<i64: 512, 512>}, {pipeline_mode = #tpu.pipeline_mode<synchronous>, transform_indices = @transform_5, window_bounds = array<i64: 1, 512>}, {pipeline_mode = #tpu.pipeline_mode<synchronous>, transform_indices = @transform_6, window_bounds = array<i64: 1, 512>}, {transform_indices = @transform_7, window_bounds = array<i64: 1, 1>}, {transform_indices = @transform_8, window_bounds = array<i64: 16, 1>}]} {
    %c0 = arith.constant 0 : index
    %c0_0 = arith.constant 0 : index
    %0 = vector.load %arg1[%c0, %c0_0] : memref<16x128xbf16, #tpu.memory_space<vmem>>, vector<16x128xbf16>
    %c0_1 = arith.constant 0 : index
    %c0_2 = arith.constant 0 : index
    %1 = vector.load %arg2[%c0_1, %c0_2] : memref<128x512xbf16, #tpu.memory_space<vmem>>, vector<128x512xbf16>
    %cst = arith.constant dense<0.000000e+00> : vector<16x512xf32>
    %2 = tpu.matmul %0, %1, %cst {dimension_numbers = #tpu.dot_dimension_numbers<[1], [0], [0], [1], [0, 0, 1, 1], [], []>} : vector<16x128xbf16>, vector<128x512xbf16>, vector<16x512xf32> -> vector<16x512xf32>
    %cst_3 = arith.constant 0.000000e+00 : f32
    %3 = vector.broadcast %cst_3 : f32 to vector<16x512xf32>
    %4 = arith.maximumf %2, %3 : vector<16x512xf32>
    %5 = arith.truncf %4 : vector<16x512xf32> to vector<16x512xbf16>
    %c0_4 = arith.constant 0 : index
    %c0_5 = arith.constant 0 : index
    %6 = vector.load %arg3[%c0_4, %c0_5] : memref<512x512xbf16, #tpu.memory_space<vmem>>, vector<512x512xbf16>
    %cst_6 = arith.constant dense<0.000000e+00> : vector<16x512xf32>
    %7 = tpu.matmul %5, %6, %cst_6 {dimension_numbers = #tpu.dot_dimension_numbers<[1], [0], [0], [1], [0, 0, 1, 1], [], []>} : vector<16x512xbf16>, vector<512x512xbf16>, vector<16x512xf32> -> vector<16x512xf32>
    %c0_7 = arith.constant 0 : index
    %c0_8 = arith.constant 0 : index
    %8 = vector.load %arg4[%c0_7, %c0_8] : memref<1x512xf32, #tpu.memory_space<vmem>>, vector<1x512xf32>
    %9 = vector.broadcast %8 : vector<1x512xf32> to vector<16x512xf32>
    %10 = arith.addf %7, %9 : vector<16x512xf32>
    %cst_9 = arith.constant 0.000000e+00 : f32
    %11 = vector.broadcast %cst_9 : f32 to vector<16x512xf32>
    %12 = arith.maximumf %10, %11 : vector<16x512xf32>
    %13 = arith.truncf %12 : vector<16x512xf32> to vector<16x512xbf16>
    %c0_10 = arith.constant 0 : index
    %c0_11 = arith.constant 0 : index
    %14 = vector.load %arg5[%c0_10, %c0_11] : memref<512x512xbf16, #tpu.memory_space<vmem>>, vector<512x512xbf16>
    %cst_12 = arith.constant dense<0.000000e+00> : vector<16x512xf32>
    %15 = tpu.matmul %13, %14, %cst_12 {dimension_numbers = #tpu.dot_dimension_numbers<[1], [0], [0], [1], [0, 0, 1, 1], [], []>} : vector<16x512xbf16>, vector<512x512xbf16>, vector<16x512xf32> -> vector<16x512xf32>
    %c0_13 = arith.constant 0 : index
    %c0_14 = arith.constant 0 : index
    %16 = vector.load %arg6[%c0_13, %c0_14] : memref<1x512xf32, #tpu.memory_space<vmem>>, vector<1x512xf32>
    %17 = vector.broadcast %16 : vector<1x512xf32> to vector<16x512xf32>
    %18 = arith.addf %15, %17 : vector<16x512xf32>
    %cst_15 = arith.constant 0.000000e+00 : f32
    %19 = vector.broadcast %cst_15 : f32 to vector<16x512xf32>
    %20 = arith.maximumf %18, %19 : vector<16x512xf32>
    %c0_16 = arith.constant 0 : index
    %c0_17 = arith.constant 0 : index
    %21 = vector.load %arg7[%c0_16, %c0_17] : memref<1x512xf32, #tpu.memory_space<vmem>>, vector<1x512xf32>
    %22 = vector.broadcast %21 : vector<1x512xf32> to vector<16x512xf32>
    %23 = arith.mulf %20, %22 : vector<16x512xf32>
    %cst_18 = arith.constant dense<0.000000e+00> : vector<16xf32>
    %24 = vector.multi_reduction <add>, %23, %cst_18 [1] : vector<16x512xf32> to vector<16xf32>
    %25 = vector.shape_cast %24 : vector<16xf32> to vector<16x1xf32>
    %c0_19 = arith.constant 0 : index
    %c0_20 = arith.constant 0 : index
    %26 = memref.load %arg8[%c0_19, %c0_20] : memref<1x1xf32, #tpu.memory_space<smem>>
    %27 = vector.broadcast %26 : f32 to vector<16x1xf32>
    %28 = arith.addf %25, %27 : vector<16x1xf32>
    %c0_21 = arith.constant 0 : index
    %c0_22 = arith.constant 0 : index
    %29 = vector.load %arg9[%c0_21, %c0_22] : memref<16x1xf32, #tpu.memory_space<vmem>>, vector<16x1xf32>
    tpu.vector_store %arg9[%c0_21, %c0_22], %28 {strides = array<i32>} : memref<16x1xf32, #tpu.memory_space<vmem>>, vector<16x1xf32>,
    return
  }
  func.func @transform_0(%arg0: i32) -> (i32, i32) {
    %c0_i32 = arith.constant 0 : i32
    %c0_i32_0 = arith.constant 0 : i32
    return %arg0, %c0_i32 : i32, i32
  }
  func.func @transform_1(%arg0: i32) -> (i32, i32) {
    %c0_i32 = arith.constant 0 : i32
    %c0_i32_0 = arith.constant 0 : i32
    %c0_i32_1 = arith.constant 0 : i32
    return %c0_i32, %c0_i32_0 : i32, i32
  }
  func.func @transform_2(%arg0: i32) -> (i32, i32) {
    %c0_i32 = arith.constant 0 : i32
    %c0_i32_0 = arith.constant 0 : i32
    %c0_i32_1 = arith.constant 0 : i32
    return %c0_i32, %c0_i32_0 : i32, i32
  }
  func.func @transform_3(%arg0: i32) -> (i32, i32) {
    %c0_i32 = arith.constant 0 : i32
    %c0_i32_0 = arith.constant 0 : i32
    %c0_i32_1 = arith.constant 0 : i32
    return %c0_i32, %c0_i32_0 : i32, i32
  }
  func.func @transform_4(%arg0: i32) -> (i32, i32) {
    %c0_i32 = arith.constant 0 : i32
    %c0_i32_0 = arith.constant 0 : i32
    %c0_i32_1 = arith.constant 0 : i32
    return %c0_i32, %c0_i32_0 : i32, i32
  }
  func.func @transform_5(%arg0: i32) -> (i32, i32) {
    %c0_i32 = arith.constant 0 : i32
    %c0_i32_0 = arith.constant 0 : i32
    %c0_i32_1 = arith.constant 0 : i32
    return %c0_i32, %c0_i32_0 : i32, i32
  }
  func.func @transform_6(%arg0: i32) -> (i32, i32) {
    %c0_i32 = arith.constant 0 : i32
    %c0_i32_0 = arith.constant 0 : i32
    %c0_i32_1 = arith.constant 0 : i32
    return %c0_i32, %c0_i32_0 : i32, i32
  }
  func.func @transform_7(%arg0: i32) -> (i32, i32) {
    %c0_i32 = arith.constant 0 : i32
    %c0_i32_0 = arith.constant 0 : i32
    %c0_i32_1 = arith.constant 0 : i32
    return %c0_i32, %c0_i32_0 : i32, i32
  }
  func.func @transform_8(%arg0: i32) -> (i32, i32) {
    %c0_i32 = arith.constant 0 : i32
    %c0_i32_0 = arith.constant 0 : i32
    return %arg0, %c0_i32 : i32, i32
  }
}

</mosaic_0001>

<llo_original>
// kernel: tpu_custom_call.1
$region0: #{tpu_custom_call.1}
  #allocation0 [shape = 'u32[]', space=smem, size = 0x4, offset = 0x4, fixed_abs, tag = 'smem constant byte address 0x4 - core index']
  #allocation1 [shape = 'u32[72,128]{1,0:T(1,128)}', space=vmem, size = 0x9000, scoped, tag = 'internal scratch']
  #allocation2 [shape = 'f32[1,1]{1,0:T(1,128)S(6)}', space=smem, size = 0x200, scoped, tag = 'scoped memory for tpu_custom_call.1']
  %s0 = inlined_call_operand.hbm [shape: bf16[16,128], index: 0, kind: input, shape index: {}]
  %s1 = inlined_call_operand.hbm [shape: bf16[128,512], index: 1, kind: input, shape index: {}]
  %s2 = inlined_call_operand.hbm [shape: bf16[512,512], index: 2, kind: input, shape index: {}]
  %s3 = inlined_call_operand.vmem [shape: f32[1,512], index: 3, kind: input, shape index: {}]
  %s4 = inlined_call_operand.hbm [shape: bf16[512,512], index: 4, kind: input, shape index: {}]
  %s5 = inlined_call_operand.hbm [shape: f32[1,512], index: 5, kind: input, shape index: {}]
  %s6 = inlined_call_operand.hbm [shape: f32[1,512], index: 6, kind: input, shape index: {}]
  %s7 = inlined_call_operand.<no memory space> [shape: f32[1,1], index: 7, kind: input, shape index: {}]
  %s8 = inlined_call_operand.vmem [shape: f32[16,1], index: 8, kind: output, shape index: {}]
  %s9 = sld [smem:[#allocation0]]
  $region66: #{tpu_custom_call.1} parent=0
    _
  %s11 = ssub.s32 1, %s9
  %s12 = scalar_select 0, %s11, %s9
  %13 = sst [smem:[#allocation2]] %s7
  $region1: #{tpu_custom_call.1} parent=0
    #allocation3 [shape = 'u8[4096]{0}', space=vmem, size = 0x1000, scoped, tag = 'input window, operand 0, single buffered']
    #allocation4 [shape = 's32[1]{0}', space=sflag, size = 0x4, scoped, tag = 'scoped memory for tpu_custom_call.1']
    #allocation5 [shape = 'u8[131072]{0}', space=vmem, size = 0x20000, scoped, tag = 'input window, operand 1, single buffered']
    #allocation6 [shape = 's32[1]{0}', space=sflag, size = 0x4, scoped, tag = 'scoped memory for tpu_custom_call.1']
    #allocation7 [shape = 'u8[524288]{0}', space=vmem, size = 0x80000, scoped, tag = 'input window, operand 2, single buffered']
    #allocation8 [shape = 'u8[524288]{0}', space=vmem, size = 0x80000, scoped, tag = 'input window, operand 4, single buffered']
    #allocation9 [shape = 's32[1]{0}', space=sflag, size = 0x4, scoped, tag = 'scoped memory for tpu_custom_call.1']
    #allocation10 [shape = 'u8[2048]{0}', space=vmem, size = 0x800, scoped, tag = 'input window, operand 5, single buffered']
    #allocation11 [shape = 'u8[2048]{0}', space=vmem, size = 0x800, scoped, tag = 'input window, operand 6, single buffered']
    #allocation12 [shape = 's32[1]{0}', space=sflag, size = 0x4, scoped, tag = 'scoped memory for tpu_custom_call.1']
    %14 = vsyncpa [#allocation4], 0
    %15 = vsyncpa [#allocation6], 0
    %16 = vsyncpa [#allocation9], 0
    %17 = vsyncpa [#allocation12], 0
    // Predicated region
    $region2: #{tpu_custom_call.1} parent=1 // pred_check
      _
    $region3: #{tpu_custom_call.1} parent=1 // pred_check_branch
      %19 = sbr.rel (0) target = $region5
    $region4: #{tpu_custom_call.1} parent=1 // pred_region
      %21 = vsyncadd [#allocation4], 0
      %s22 = sshll.u32 %s0, 4
      %s23 = int_to_ptr.hbm [resolvable:$true] %s22
      %s24 = sshll.u32 [#allocation3], 4
      %s25 = int_to_ptr.vmem [resolvable:$true] %s24
      %30 = dma.hbm_to_vmem [thread:$0]  %s23, 128, %s25, [#allocation4], 64, 64, 4
    $region5: #{tpu_custom_call.1} parent=1 // pred_fallthru
      _
    // Predicated region
    $region6: #{tpu_custom_call.1} parent=1 // pred_check
      _
    $region7: #{tpu_custom_call.1} parent=1 // pred_check_branch
      %32 = sbr.rel (0) target = $region9
    $region8: #{tpu_custom_call.1} parent=1 // pred_region
      %34 = vsyncadd [#allocation6], 0
      %s35 = sshll.u32 %s1, 4
      %s36 = int_to_ptr.hbm [resolvable:$true] %s35
      %s37 = sshll.u32 [#allocation5], 4
      %s38 = int_to_ptr.vmem [resolvable:$true] %s37
      %43 = dma.hbm_to_vmem [thread:$0]  %s36, 4096, %s38, [#allocation6], 256, 256, 16
    $region9: #{tpu_custom_call.1} parent=1 // pred_fallthru
      _
    // Predicated region
    $region10: #{tpu_custom_call.1} parent=1 // pred_check
      _
    $region11: #{tpu_custom_call.1} parent=1 // pred_check_branch
      %45 = sbr.rel (0) target = $region13
    $region12: #{tpu_custom_call.1} parent=1 // pred_region
      %47 = vsyncadd [#allocation6], 0
      %s48 = sshll.u32 %s2, 4
      %s49 = int_to_ptr.hbm [resolvable:$true] %s48
      %s50 = sshll.u32 [#allocation7], 4
      %s51 = int_to_ptr.vmem [resolvable:$true] %s50
      %56 = dma.hbm_to_vmem [thread:$0]  %s49, 16384, %s51, [#allocation6], 256, 256, 16
    $region13: #{tpu_custom_call.1} parent=1 // pred_fallthru
      _
    // Predicated region
    $region14: #{tpu_custom_call.1} parent=1 // pred_check
      _
    $region15: #{tpu_custom_call.1} parent=1 // pred_check_branch
      %58 = sbr.rel (0) target = $region17
    $region16: #{tpu_custom_call.1} parent=1 // pred_region
      _
    $region17: #{tpu_custom_call.1} parent=1 // pred_fallthru
      _
    // Predicated region
    $region18: #{tpu_custom_call.1} parent=1 // pred_check
      _
    $region19: #{tpu_custom_call.1} parent=1 // pred_check_branch
      %60 = sbr.rel (0) target = $region21
    $region20: #{tpu_custom_call.1} parent=1 // pred_region
      %62 = vsyncadd [#allocation9], 0
      %s63 = sshll.u32 %s4, 4
      %s64 = int_to_ptr.hbm [resolvable:$true] %s63
      %s65 = sshll.u32 [#allocation8], 4
      %s66 = int_to_ptr.vmem [resolvable:$true] %s65
      %71 = dma.hbm_to_vmem [thread:$0]  %s64, 16384, %s66, [#allocation9], 256, 256, 16
    $region21: #{tpu_custom_call.1} parent=1 // pred_fallthru
      _
    // Predicated region
    $region22: #{tpu_custom_call.1} parent=1 // pred_check
      _
    $region23: #{tpu_custom_call.1} parent=1 // pred_check_branch
      %73 = sbr.rel (0) target = $region25
    $region24: #{tpu_custom_call.1} parent=1 // pred_region
      %75 = vsyncadd [#allocation9], 0
      %s77 = sshll.u32 %s5, 4
      %s78 = int_to_ptr.hbm [resolvable:$true] %s77
      %s79 = sshll.u32 [#allocation10], 4
      %s80 = int_to_ptr.vmem [resolvable:$true] %s79
      %82 = dma.hbm_to_vmem [thread:$0]  %s78, 64, %s80, [#allocation9]
    $region25: #{tpu_custom_call.1} parent=1 // pred_fallthru
      _
    // Predicated region
    $region26: #{tpu_custom_call.1} parent=1 // pred_check
      _
    $region27: #{tpu_custom_call.1} parent=1 // pred_check_branch
      %84 = sbr.rel (0) target = $region29
    $region28: #{tpu_custom_call.1} parent=1 // pred_region
      %86 = vsyncadd [#allocation12], 0
      %s88 = sshll.u32 %s6, 4
      %s89 = int_to_ptr.hbm [resolvable:$true] %s88
      %s90 = sshll.u32 [#allocation11], 4
      %s91 = int_to_ptr.vmem [resolvable:$true] %s90
      %93 = dma.hbm_to_vmem [thread:$0]  %s89, 64, %s91, [#allocation12]
    $region29: #{tpu_custom_call.1} parent=1 // pred_fallthru
      _
    // Predicated region
    $region30: #{tpu_custom_call.1} parent=1 // pred_check
      _
    $region31: #{tpu_custom_call.1} parent=1 // pred_check_branch
      %95 = sbr.rel (0) target = $region33
    $region32: #{tpu_custom_call.1} parent=1 // pred_region
      _
    $region33: #{tpu_custom_call.1} parent=1 // pred_fallthru
      _
    // Predicated region
    $region34: #{tpu_custom_call.1} parent=1 // pred_check
      _
    $region35: #{tpu_custom_call.1} parent=1 // pred_check_branch
      %97 = sbr.rel (0) target = $region37
    $region36: #{tpu_custom_call.1} parent=1 // pred_region
      %99 = dma.done [#allocation4], 128
    $region37: #{tpu_custom_call.1} parent=1 // pred_fallthru
      _
    // Predicated region
    $region38: #{tpu_custom_call.1} parent=1 // pred_check
      _
    $region39: #{tpu_custom_call.1} parent=1 // pred_check_branch
      %101 = sbr.rel (0) target = $region41
    $region40: #{tpu_custom_call.1} parent=1 // pred_region
      %103 = dma.done [#allocation6], 4096
    $region41: #{tpu_custom_call.1} parent=1 // pred_fallthru
      _
    // Predicated region
    $region42: #{tpu_custom_call.1} parent=1 // pred_check
      _
    $region43: #{tpu_custom_call.1} parent=1 // pred_check_branch
      %105 = sbr.rel (0) target = $region45
    $region44: #{tpu_custom_call.1} parent=1 // pred_region
      %107 = dma.done [#allocation6], 16384
    $region45: #{tpu_custom_call.1} parent=1 // pred_fallthru
      _
    // Predicated region
    $region46: #{tpu_custom_call.1} parent=1 // pred_check
      _
    $region47: #{tpu_custom_call.1} parent=1 // pred_check_branch
      %109 = sbr.rel (0) target = $region49
    $region48: #{tpu_custom_call.1} parent=1 // pred_region
      %111 = dma.done [#allocation9], 16384
    $region49: #{tpu_custom_call.1} parent=1 // pred_fallthru
      _
    // Predicated region
    $region50: #{tpu_custom_call.1} parent=1 // pred_check
      _
    $region51: #{tpu_custom_call.1} parent=1 // pred_check_branch
      %113 = sbr.rel (0) target = $region53
    $region52: #{tpu_custom_call.1} parent=1 // pred_region
      %115 = dma.done [#allocation9], 64
    $region53: #{tpu_custom_call.1} parent=1 // pred_fallthru
      _
    // Predicated region
    $region54: #{tpu_custom_call.1} parent=1 // pred_check
      _
    $region55: #{tpu_custom_call.1} parent=1 // pred_check_branch
      %117 = sbr.rel (0) target = $region57
    $region56: #{tpu_custom_call.1} parent=1 // pred_region
      %119 = dma.done [#allocation12], 64
    $region57: #{tpu_custom_call.1} parent=1 // pred_fallthru
      _
    %v120 = vld [vmem:[#allocation3] sm:$0xf]
    %v121 = vld [vmem:[#allocation3 + $0x4] sm:$0xf]
    %v122 = vld [vmem:[#allocation5] sm:$0xff]
    %v123 = vld [vmem:[#allocation5 + $0x8] sm:$0xff]
    %v124 = vld [vmem:[#allocation5 + $0x10] sm:$0xff]
    %v125 = vld [vmem:[#allocation5 + $0x18] sm:$0xff]
    %v126 = vld [vmem:[#allocation5 + $0x20] sm:$0xff]
    %v127 = vld [vmem:[#allocation5 + $0x28] sm:$0xff]
    %v128 = vld [vmem:[#allocation5 + $0x30] sm:$0xff]
    %v129 = vld [vmem:[#allocation5 + $0x38] sm:$0xff]
    %v130 = vld [vmem:[#allocation5 + $0x40] sm:$0xff]
    %v131 = vld [vmem:[#allocation5 + $0x48] sm:$0xff]
    %v132 = vld [vmem:[#allocation5 + $0x50] sm:$0xff]
    %v133 = vld [vmem:[#allocation5 + $0x58] sm:$0xff]
    %v134 = vld [vmem:[#allocation5 + $0x60] sm:$0xff]
    %v135 = vld [vmem:[#allocation5 + $0x68] sm:$0xff]
    %v136 = vld [vmem:[#allocation5 + $0x70] sm:$0xff]
    %v137 = vld [vmem:[#allocation5 + $0x78] sm:$0xff]
    %v138 = vld [vmem:[#allocation5 + $0x80] sm:$0xff]
    %v139 = vld [vmem:[#allocation5 + $0x88] sm:$0xff]
    %v140 = vld [vmem:[#allocation5 + $0x90] sm:$0xff]
    %v141 = vld [vmem:[#allocation5 + $0x98] sm:$0xff]
    %v142 = vld [vmem:[#allocation5 + $0xa0] sm:$0xff]
    %v143 = vld [vmem:[#allocation5 + $0xa8] sm:$0xff]
    %v144 = vld [vmem:[#allocation5 + $0xb0] sm:$0xff]
    %v145 = vld [vmem:[#allocation5 + $0xb8] sm:$0xff]
    %v146 = vld [vmem:[#allocation5 + $0xc0] sm:$0xff]
    %v147 = vld [vmem:[#allocation5 + $0xc8] sm:$0xff]
    %v148 = vld [vmem:[#allocation5 + $0xd0] sm:$0xff]
    %v149 = vld [vmem:[#allocation5 + $0xd8] sm:$0xff]
    %v150 = vld [vmem:[#allocation5 + $0xe0] sm:$0xff]
    %v151 = vld [vmem:[#allocation5 + $0xe8] sm:$0xff]
    %v152 = vld [vmem:[#allocation5 + $0xf0] sm:$0xff]
    %v153 = vld [vmem:[#allocation5 + $0xf8] sm:$0xff]
    %v156 = vunpack.c.l.b16 %v120
    %v157 = vunpack.c.l.b16 %v121
    %v158 = vpack.c.b16 %v157, %v156
    %v192 = vunpack.c.l.b16 %v122
    %v193 = vunpack.c.h.b16 %v122
    %v194 = vunpack.c.l.b16 %v123
    %v195 = vunpack.c.h.b16 %v123
    %v196 = vunpack.c.l.b16 %v124
    %v197 = vunpack.c.h.b16 %v124
    %v198 = vunpack.c.l.b16 %v125
    %v199 = vunpack.c.h.b16 %v125
    %v200 = vunpack.c.l.b16 %v126
    %v201 = vunpack.c.h.b16 %v126
    %v202 = vunpack.c.l.b16 %v127
    %v203 = vunpack.c.h.b16 %v127
    %v204 = vunpack.c.l.b16 %v128
    %v205 = vunpack.c.h.b16 %v128
    %v206 = vunpack.c.l.b16 %v129
    %v207 = vunpack.c.h.b16 %v129
    %v208 = vunpack.c.l.b16 %v130
    %v209 = vunpack.c.h.b16 %v130
    %v210 = vunpack.c.l.b16 %v131
    %v211 = vunpack.c.h.b16 %v131
    %v212 = vunpack.c.l.b16 %v132
    %v213 = vunpack.c.h.b16 %v132
    %v214 = vunpack.c.l.b16 %v133
    %v215 = vunpack.c.h.b16 %v133
    %v216 = vunpack.c.l.b16 %v134
    %v217 = vunpack.c.h.b16 %v134
    %v218 = vunpack.c.l.b16 %v135
    %v219 = vunpack.c.h.b16 %v135
    %v220 = vunpack.c.l.b16 %v136
    %v221 = vunpack.c.h.b16 %v136
    %v222 = vunpack.c.l.b16 %v137
    %v223 = vunpack.c.h.b16 %v137
    %v224 = vunpack.c.l.b16 %v138
    %v225 = vunpack.c.h.b16 %v138
    %v226 = vunpack.c.l.b16 %v139
    %v227 = vunpack.c.h.b16 %v139
    %v228 = vunpack.c.l.b16 %v140
    %v229 = vunpack.c.h.b16 %v140
    %v230 = vunpack.c.l.b16 %v141
    %v231 = vunpack.c.h.b16 %v141
    %v232 = vunpack.c.l.b16 %v142
    %v233 = vunpack.c.h.b16 %v142
    %v234 = vunpack.c.l.b16 %v143
    %v235 = vunpack.c.h.b16 %v143
    %v236 = vunpack.c.l.b16 %v144
    %v237 = vunpack.c.h.b16 %v144
    %v238 = vunpack.c.l.b16 %v145
    %v239 = vunpack.c.h.b16 %v145
    %v240 = vunpack.c.l.b16 %v146
    %v241 = vunpack.c.h.b16 %v146
    %v242 = vunpack.c.l.b16 %v147
    %v243 = vunpack.c.h.b16 %v147
    %v244 = vunpack.c.l.b16 %v148
    %v245 = vunpack.c.h.b16 %v148
    %v246 = vunpack.c.l.b16 %v149
    %v247 = vunpack.c.h.b16 %v149
    %v248 = vunpack.c.l.b16 %v150
    %v249 = vunpack.c.h.b16 %v150
    %v250 = vunpack.c.l.b16 %v151
    %v251 = vunpack.c.h.b16 %v151
    %v252 = vunpack.c.l.b16 %v152
    %v253 = vunpack.c.h.b16 %v152
    %v254 = vunpack.c.l.b16 %v153
    %v255 = vunpack.c.h.b16 %v153
    %v256 = vpack.c.b16 %v196, %v192
    %v257 = vpack.c.b16 %v197, %v193
    %v258 = vpack.c.b16 %v198, %v194
    %v259 = vpack.c.b16 %v199, %v195
    %v260 = vpack.c.b16 %v204, %v200
    %v261 = vpack.c.b16 %v205, %v201
    %v262 = vpack.c.b16 %v206, %v202
    %v263 = vpack.c.b16 %v207, %v203
    %v264 = vpack.c.b16 %v212, %v208
    %v265 = vpack.c.b16 %v213, %v209
    %v266 = vpack.c.b16 %v214, %v210
    %v267 = vpack.c.b16 %v215, %v211
    %v268 = vpack.c.b16 %v220, %v216
    %v269 = vpack.c.b16 %v221, %v217
    %v270 = vpack.c.b16 %v222, %v218
    %v271 = vpack.c.b16 %v223, %v219
    %v272 = vpack.c.b16 %v228, %v224
    %v273 = vpack.c.b16 %v229, %v225
    %v274 = vpack.c.b16 %v230, %v226
    %v275 = vpack.c.b16 %v231, %v227
    %v276 = vpack.c.b16 %v236, %v232
    %v277 = vpack.c.b16 %v237, %v233
    %v278 = vpack.c.b16 %v238, %v234
    %v279 = vpack.c.b16 %v239, %v235
    %v280 = vpack.c.b16 %v244, %v240
    %v281 = vpack.c.b16 %v245, %v241
    %v282 = vpack.c.b16 %v246, %v242
    %v283 = vpack.c.b16 %v247, %v243
    %v284 = vpack.c.b16 %v252, %v248
    %v285 = vpack.c.b16 %v253, %v249
    %v286 = vpack.c.b16 %v254, %v250
    %v287 = vpack.c.b16 %v255, %v251
    %320 = vmatpush.bf16.msra.mxu0 %v284
    %321 = vmatpush.bf16.msra.mxu0 %v280
    %322 = vmatpush.bf16.msra.mxu0 %v276
    %323 = vmatpush.bf16.msra.mxu0 %v272
    %324 = vmatpush.bf16.msra.mxu0 %v268
    %325 = vmatpush.bf16.msra.mxu0 %v264
    %326 = vmatpush.bf16.msra.mxu0 %v260
    %327 = vmatpush.bf16.msra.mxu0 %v256
    %328 = vmatmul.bf16.gmra.mxu0 %v158
    %v329 = vpop.f32.mrf.mxu0
    %v330 = vadd.f32 0.0, %v329
    %v331 = vpop.f32.mrf.mxu0
    %v332 = vadd.f32 0.0, %v331
    %333 = vdwg.mxu0
    %334 = vmatpush.bf16.msra.mxu0 %v285
    %335 = vmatpush.bf16.msra.mxu0 %v281
    %336 = vmatpush.bf16.msra.mxu0 %v277
    %337 = vmatpush.bf16.msra.mxu0 %v273
    %338 = vmatpush.bf16.msra.mxu0 %v269
    %339 = vmatpush.bf16.msra.mxu0 %v265
    %340 = vmatpush.bf16.msra.mxu0 %v261
    %341 = vmatpush.bf16.msra.mxu0 %v257
    %342 = vmatmul.bf16.gmra.mxu0 %v158
    %v343 = vpop.f32.mrf.mxu0
    %v344 = vadd.f32 0.0, %v343
    %v345 = vpop.f32.mrf.mxu0
    %v346 = vadd.f32 0.0, %v345
    %347 = vdwg.mxu0
    %348 = vmatpush.bf16.msra.mxu0 %v286
    %349 = vmatpush.bf16.msra.mxu0 %v282
    %350 = vmatpush.bf16.msra.mxu0 %v278
    %351 = vmatpush.bf16.msra.mxu0 %v274
    %352 = vmatpush.bf16.msra.mxu0 %v270
    %353 = vmatpush.bf16.msra.mxu0 %v266
    %354 = vmatpush.bf16.msra.mxu0 %v262
    %355 = vmatpush.bf16.msra.mxu0 %v258
    %356 = vmatmul.bf16.gmra.mxu0 %v158
    %v357 = vpop.f32.mrf.mxu0
    %v358 = vadd.f32 0.0, %v357
    %v359 = vpop.f32.mrf.mxu0
    %v360 = vadd.f32 0.0, %v359
    %361 = vdwg.mxu0
    %362 = vmatpush.bf16.msra.mxu0 %v287
    %363 = vmatpush.bf16.msra.mxu0 %v283
    %364 = vmatpush.bf16.msra.mxu0 %v279
    %365 = vmatpush.bf16.msra.mxu0 %v275
    %366 = vmatpush.bf16.msra.mxu0 %v271
    %367 = vmatpush.bf16.msra.mxu0 %v267
    %368 = vmatpush.bf16.msra.mxu0 %v263
    %369 = vmatpush.bf16.msra.mxu0 %v259
    %370 = vmatmul.bf16.gmra.mxu0 %v158
    %v371 = vpop.f32.mrf.mxu0
    %v372 = vadd.f32 0.0, %v371
    %v373 = vpop.f32.mrf.mxu0
    %v374 = vadd.f32 0.0, %v373
    %375 = vdwg.mxu0
    %v376 = vmax.f32 %v330, 0.0
    %v377 = vmax.f32 %v344, 0.0
    %v378 = vmax.f32 %v358, 0.0
    %v379 = vmax.f32 %v372, 0.0
    %v380 = vmax.f32 %v332, 0.0
    %v381 = vmax.f32 %v346, 0.0
    %v382 = vmax.f32 %v360, 0.0
    %v383 = vmax.f32 %v374, 0.0
    %v384 = vpack.c.bf16 %v380, %v376
    %v385 = vpack.c.bf16 %v381, %v377
    %v386 = vpack.c.bf16 %v382, %v378
    %v387 = vpack.c.bf16 %v383, %v379
    %v388 = vld [vmem:[#allocation7] sm:$0xff]
    %v389 = vld [vmem:[#allocation7 + $0x8] sm:$0xff]
    %v390 = vld [vmem:[#allocation7 + $0x10] sm:$0xff]
    %v391 = vld [vmem:[#allocation7 + $0x18] sm:$0xff]
    %v392 = vld [vmem:[#allocation7 + $0x20] sm:$0xff]
    %v393 = vld [vmem:[#allocation7 + $0x28] sm:$0xff]
    %v394 = vld [vmem:[#allocation7 + $0x30] sm:$0xff]
    %v395 = vld [vmem:[#allocation7 + $0x38] sm:$0xff]
    %v396 = vld [vmem:[#allocation7 + $0x40] sm:$0xff]
    %v397 = vld [vmem:[#allocation7 + $0x48] sm:$0xff]
    %v398 = vld [vmem:[#allocation7 + $0x50] sm:$0xff]
    %v399 = vld [vmem:[#allocation7 + $0x58] sm:$0xff]
    %v400 = vld [vmem:[#allocation7 + $0x60] sm:$0xff]
    %v401 = vld [vmem:[#allocation7 + $0x68] sm:$0xff]
    %v402 = vld [vmem:[#allocation7 + $0x70] sm:$0xff]
    %v403 = vld [vmem:[#allocation7 + $0x78] sm:$0xff]
    %v404 = vld [vmem:[#allocation7 + $0x80] sm:$0xff]
    %v405 = vld [vmem:[#allocation7 + $0x88] sm:$0xff]
    %v406 = vld [vmem:[#allocation7 + $0x90] sm:$0xff]
    %v407 = vld [vmem:[#allocation7 + $0x98] sm:$0xff]
    %v408 = vld [vmem:[#allocation7 + $0xa0] sm:$0xff]
    %v409 = vld [vmem:[#allocation7 + $0xa8] sm:$0xff]
    %v410 = vld [vmem:[#allocation7 + $0xb0] sm:$0xff]
    %v411 = vld [vmem:[#allocation7 + $0xb8] sm:$0xff]
    %v412 = vld [vmem:[#allocation7 + $0xc0] sm:$0xff]
    %v413 = vld [vmem:[#allocation7 + $0xc8] sm:$0xff]
    %v414 = vld [vmem:[#allocation7 + $0xd0] sm:$0xff]
    %v415 = vld [vmem:[#allocation7 + $0xd8] sm:$0xff]
    %v416 = vld [vmem:[#allocation7 + $0xe0] sm:$0xff]
    %v417 = vld [vmem:[#allocation7 + $0xe8] sm:$0xff]
    %v418 = vld [vmem:[#allocation7 + $0xf0] sm:$0xff]
    %v419 = vld [vmem:[#allocation7 + $0xf8] sm:$0xff]
    %v420 = vld [vmem:[#allocation7 + $0x100] sm:$0xff]
    %v421 = vld [vmem:[#allocation7 + $0x108] sm:$0xff]
    %v422 = vld [vmem:[#allocation7 + $0x110] sm:$0xff]
    %v423 = vld [vmem:[#allocation7 + $0x118] sm:$0xff]
    %v424 = vld [vmem:[#allocation7 + $0x120] sm:$0xff]
    %v425 = vld [vmem:[#allocation7 + $0x128] sm:$0xff]
    %v426 = vld [vmem:[#allocation7 + $0x130] sm:$0xff]
    %v427 = vld [vmem:[#allocation7 + $0x138] sm:$0xff]
    %v428 = vld [vmem:[#allocation7 + $0x140] sm:$0xff]
    %v429 = vld [vmem:[#allocation7 + $0x148] sm:$0xff]
    %v430 = vld [vmem:[#allocation7 + $0x150] sm:$0xff]
    %v431 = vld [vmem:[#allocation7 + $0x158] sm:$0xff]
    %v432 = vld [vmem:[#allocation7 + $0x160] sm:$0xff]
    %v433 = vld [vmem:[#allocation7 + $0x168] sm:$0xff]
    %v434 = vld [vmem:[#allocation7 + $0x170] sm:$0xff]
    %v435 = vld [vmem:[#allocation7 + $0x178] sm:$0xff]
    %v436 = vld [vmem:[#allocation7 + $0x180] sm:$0xff]
    %v437 = vld [vmem:[#allocation7 + $0x188] sm:$0xff]
    %v438 = vld [vmem:[#allocation7 + $0x190] sm:$0xff]
    %v439 = vld [vmem:[#allocation7 + $0x198] sm:$0xff]
    %v440 = vld [vmem:[#allocation7 + $0x1a0] sm:$0xff]
    %v441 = vld [vmem:[#allocation7 + $0x1a8] sm:$0xff]
    %v442 = vld [vmem:[#allocation7 + $0x1b0] sm:$0xff]
    %v443 = vld [vmem:[#allocation7 + $0x1b8] sm:$0xff]
    %v444 = vld [vmem:[#allocation7 + $0x1c0] sm:$0xff]
    %v445 = vld [vmem:[#allocation7 + $0x1c8] sm:$0xff]
    %v446 = vld [vmem:[#allocation7 + $0x1d0] sm:$0xff]
    %v447 = vld [vmem:[#allocation7 + $0x1d8] sm:$0xff]
    %v448 = vld [vmem:[#allocation7 + $0x1e0] sm:$0xff]
    %v449 = vld [vmem:[#allocation7 + $0x1e8] sm:$0xff]
    %v450 = vld [vmem:[#allocation7 + $0x1f0] sm:$0xff]
    %v451 = vld [vmem:[#allocation7 + $0x1f8] sm:$0xff]
    %v452 = vld [vmem:[#allocation7 + $0x200] sm:$0xff]
    %v453 = vld [vmem:[#allocation7 + $0x208] sm:$0xff]
    %v454 = vld [vmem:[#allocation7 + $0x210] sm:$0xff]
    %v455 = vld [vmem:[#allocation7 + $0x218] sm:$0xff]
    %v456 = vld [vmem:[#allocation7 + $0x220] sm:$0xff]
    %v457 = vld [vmem:[#allocation7 + $0x228] sm:$0xff]
    %v458 = vld [vmem:[#allocation7 + $0x230] sm:$0xff]
    %v459 = vld [vmem:[#allocation7 + $0x238] sm:$0xff]
    %v460 = vld [vmem:[#allocation7 + $0x240] sm:$0xff]
    %v461 = vld [vmem:[#allocation7 + $0x248] sm:$0xff]
    %v462 = vld [vmem:[#allocation7 + $0x250] sm:$0xff]
    %v463 = vld [vmem:[#allocation7 + $0x258] sm:$0xff]
    %v464 = vld [vmem:[#allocation7 + $0x260] sm:$0xff]
    %v465 = vld [vmem:[#allocation7 + $0x268] sm:$0xff]
    %v466 = vld [vmem:[#allocation7 + $0x270] sm:$0xff]
    %v467 = vld [vmem:[#allocation7 + $0x278] sm:$0xff]
    %v468 = vld [vmem:[#allocation7 + $0x280] sm:$0xff]
    %v469 = vld [vmem:[#allocation7 + $0x288] sm:$0xff]
    %v470 = vld [vmem:[#allocation7 + $0x290] sm:$0xff]
    %v471 = vld [vmem:[#allocation7 + $0x298] sm:$0xff]
    %v472 = vld [vmem:[#allocation7 + $0x2a0] sm:$0xff]
    %v473 = vld [vmem:[#allocation7 + $0x2a8] sm:$0xff]
    %v474 = vld [vmem:[#allocation7 + $0x2b0] sm:$0xff]
    %v475 = vld [vmem:[#allocation7 + $0x2b8] sm:$0xff]
    %v476 = vld [vmem:[#allocation7 + $0x2c0] sm:$0xff]
    %v477 = vld [vmem:[#allocation7 + $0x2c8] sm:$0xff]
    %v478 = vld [vmem:[#allocation7 + $0x2d0] sm:$0xff]
    %v479 = vld [vmem:[#allocation7 + $0x2d8] sm:$0xff]
    %v480 = vld [vmem:[#allocation7 + $0x2e0] sm:$0xff]
    %v481 = vld [vmem:[#allocation7 + $0x2e8] sm:$0xff]
    %v482 = vld [vmem:[#allocation7 + $0x2f0] sm:$0xff]
    %v483 = vld [vmem:[#allocation7 + $0x2f8] sm:$0xff]
    %v484 = vld [vmem:[#allocation7 + $0x300] sm:$0xff]
    %v485 = vld [vmem:[#allocation7 + $0x308] sm:$0xff]
    %v486 = vld [vmem:[#allocation7 + $0x310] sm:$0xff]
    %v487 = vld [vmem:[#allocation7 + $0x318] sm:$0xff]
    %v488 = vld [vmem:[#allocation7 + $0x320] sm:$0xff]
    %v489 = vld [vmem:[#allocation7 + $0x328] sm:$0xff]
    %v490 = vld [vmem:[#allocation7 + $0x330] sm:$0xff]
    %v491 = vld [vmem:[#allocation7 + $0x338] sm:$0xff]
    %v492 = vld [vmem:[#allocation7 + $0x340] sm:$0xff]
    %v493 = vld [vmem:[#allocation7 + $0x348] sm:$0xff]
    %v494 = vld [vmem:[#allocation7 + $0x350] sm:$0xff]
    %v495 = vld [vmem:[#allocation7 + $0x358] sm:$0xff]
    %v496 = vld [vmem:[#allocation7 + $0x360] sm:$0xff]
    %v497 = vld [vmem:[#allocation7 + $0x368] sm:$0xff]
    %v498 = vld [vmem:[#allocation7 + $0x370] sm:$0xff]
    %v499 = vld [vmem:[#allocation7 + $0x378] sm:$0xff]
    %v500 = vld [vmem:[#allocation7 + $0x380] sm:$0xff]
    %v501 = vld [vmem:[#allocation7 + $0x388] sm:$0xff]
    %v502 = vld [vmem:[#allocation7 + $0x390] sm:$0xff]
    %v503 = vld [vmem:[#allocation7 + $0x398] sm:$0xff]
    %v504 = vld [vmem:[#allocation7 + $0x3a0] sm:$0xff]
    %v505 = vld [vmem:[#allocation7 + $0x3a8] sm:$0xff]
    %v506 = vld [vmem:[#allocation7 + $0x3b0] sm:$0xff]
    %v507 = vld [vmem:[#allocation7 + $0x3b8] sm:$0xff]
    %v508 = vld [vmem:[#allocation7 + $0x3c0] sm:$0xff]
    %v509 = vld [vmem:[#allocation7 + $0x3c8] sm:$0xff]
    %v510 = vld [vmem:[#allocation7 + $0x3d0] sm:$0xff]
    %v511 = vld [vmem:[#allocation7 + $0x3d8] sm:$0xff]
    %v512 = vld [vmem:[#allocation7 + $0x3e0] sm:$0xff]
    %v513 = vld [vmem:[#allocation7 + $0x3e8] sm:$0xff]
    %v514 = vld [vmem:[#allocation7 + $0x3f0] sm:$0xff]
    %v515 = vld [vmem:[#allocation7 + $0x3f8] sm:$0xff]
    %v516 = vld [vmem:[%s3] sm:$0xf]
    %v518 = vperm.slane %v516, 0
    %v519 = vperm.slane %v516, 1
    %v520 = vperm.slane %v516, 2
    %v521 = vperm.slane %v516, 3
    %v654 = vunpack.c.l.b16 %v388
    %v655 = vunpack.c.h.b16 %v388
    %v656 = vunpack.c.l.b16 %v389
    %v657 = vunpack.c.h.b16 %v389
    %v658 = vunpack.c.l.b16 %v390
    %v659 = vunpack.c.h.b16 %v390
    %v660 = vunpack.c.l.b16 %v391
    %v661 = vunpack.c.h.b16 %v391
    %v662 = vunpack.c.l.b16 %v392
    %v663 = vunpack.c.h.b16 %v392
    %v664 = vunpack.c.l.b16 %v393
    %v665 = vunpack.c.h.b16 %v393
    %v666 = vunpack.c.l.b16 %v394
    %v667 = vunpack.c.h.b16 %v394
    %v668 = vunpack.c.l.b16 %v395
    %v669 = vunpack.c.h.b16 %v395
    %v670 = vunpack.c.l.b16 %v396
    %v671 = vunpack.c.h.b16 %v396
    %v672 = vunpack.c.l.b16 %v397
    %v673 = vunpack.c.h.b16 %v397
    %v674 = vunpack.c.l.b16 %v398
    %v675 = vunpack.c.h.b16 %v398
    %v676 = vunpack.c.l.b16 %v399
    %v677 = vunpack.c.h.b16 %v399
    %v678 = vunpack.c.l.b16 %v400
    %v679 = vunpack.c.h.b16 %v400
    %v680 = vunpack.c.l.b16 %v401
    %v681 = vunpack.c.h.b16 %v401
    %v682 = vunpack.c.l.b16 %v402
    %v683 = vunpack.c.h.b16 %v402
    %v684 = vunpack.c.l.b16 %v403
    %v685 = vunpack.c.h.b16 %v403
    %v686 = vunpack.c.l.b16 %v404
    %v687 = vunpack.c.h.b16 %v404
    %v688 = vunpack.c.l.b16 %v405
    %v689 = vunpack.c.h.b16 %v405
    %v690 = vunpack.c.l.b16 %v406
    %v691 = vunpack.c.h.b16 %v406
    %v692 = vunpack.c.l.b16 %v407
    %v693 = vunpack.c.h.b16 %v407
    %v694 = vunpack.c.l.b16 %v408
    %v695 = vunpack.c.h.b16 %v408
    %v696 = vunpack.c.l.b16 %v409
    %v697 = vunpack.c.h.b16 %v409
    %v698 = vunpack.c.l.b16 %v410
    %v699 = vunpack.c.h.b16 %v410
    %v700 = vunpack.c.l.b16 %v411
    %v701 = vunpack.c.h.b16 %v411
    %v702 = vunpack.c.l.b16 %v412
    %v703 = vunpack.c.h.b16 %v412
    %v704 = vunpack.c.l.b16 %v413
    %v705 = vunpack.c.h.b16 %v413
    %v706 = vunpack.c.l.b16 %v414
    %v707 = vunpack.c.h.b16 %v414
    %v708 = vunpack.c.l.b16 %v415
    %v709 = vunpack.c.h.b16 %v415
    %v710 = vunpack.c.l.b16 %v416
    %v711 = vunpack.c.h.b16 %v416
    %v712 = vunpack.c.l.b16 %v417
    %v713 = vunpack.c.h.b16 %v417
    %v714 = vunpack.c.l.b16 %v418
    %v715 = vunpack.c.h.b16 %v418
    %v716 = vunpack.c.l.b16 %v419
    %v717 = vunpack.c.h.b16 %v419
    %v718 = vunpack.c.l.b16 %v420
    %v719 = vunpack.c.h.b16 %v420
    %v720 = vunpack.c.l.b16 %v421
    %v721 = vunpack.c.h.b16 %v421
    %v722 = vunpack.c.l.b16 %v422
    %v723 = vunpack.c.h.b16 %v422
    %v724 = vunpack.c.l.b16 %v423
    %v725 = vunpack.c.h.b16 %v423
    %v726 = vunpack.c.l.b16 %v424
    %v727 = vunpack.c.h.b16 %v424
    %v728 = vunpack.c.l.b16 %v425
    %v729 = vunpack.c.h.b16 %v425
    %v730 = vunpack.c.l.b16 %v426
    %v731 = vunpack.c.h.b16 %v426
    %v732 = vunpack.c.l.b16 %v427
    %v733 = vunpack.c.h.b16 %v427
    %v734 = vunpack.c.l.b16 %v428
    %v735 = vunpack.c.h.b16 %v428
    %v736 = vunpack.c.l.b16 %v429
    %v737 = vunpack.c.h.b16 %v429
    %v738 = vunpack.c.l.b16 %v430
    %v739 = vunpack.c.h.b16 %v430
    %v740 = vunpack.c.l.b16 %v431
    %v741 = vunpack.c.h.b16 %v431
    %v742 = vunpack.c.l.b16 %v432
    %v743 = vunpack.c.h.b16 %v432
    %v744 = vunpack.c.l.b16 %v433
    %v745 = vunpack.c.h.b16 %v433
    %v746 = vunpack.c.l.b16 %v434
    %v747 = vunpack.c.h.b16 %v434
    %v748 = vunpack.c.l.b16 %v435
    %v749 = vunpack.c.h.b16 %v435
    %v750 = vunpack.c.l.b16 %v436
    %v751 = vunpack.c.h.b16 %v436
    %v752 = vunpack.c.l.b16 %v437
    %v753 = vunpack.c.h.b16 %v437
    %v754 = vunpack.c.l.b16 %v438
    %v755 = vunpack.c.h.b16 %v438
    %v756 = vunpack.c.l.b16 %v439
    %v757 = vunpack.c.h.b16 %v439
    %v758 = vunpack.c.l.b16 %v440
    %v759 = vunpack.c.h.b16 %v440
    %v760 = vunpack.c.l.b16 %v441
    %v761 = vunpack.c.h.b16 %v441
    %v762 = vunpack.c.l.b16 %v442
    %v763 = vunpack.c.h.b16 %v442
    %v764 = vunpack.c.l.b16 %v443
    %v765 = vunpack.c.h.b16 %v443
    %v766 = vunpack.c.l.b16 %v444
    %v767 = vunpack.c.h.b16 %v444
    %v768 = vunpack.c.l.b16 %v445
    %v769 = vunpack.c.h.b16 %v445
    %v770 = vunpack.c.l.b16 %v446
    %v771 = vunpack.c.h.b16 %v446
    %v772 = vunpack.c.l.b16 %v447
    %v773 = vunpack.c.h.b16 %v447
    %v774 = vunpack.c.l.b16 %v448
    %v775 = vunpack.c.h.b16 %v448
    %v776 = vunpack.c.l.b16 %v449
    %v777 = vunpack.c.h.b16 %v449
    %v778 = vunpack.c.l.b16 %v450
    %v779 = vunpack.c.h.b16 %v450
    %v780 = vunpack.c.l.b16 %v451
    %v781 = vunpack.c.h.b16 %v451
    %v782 = vunpack.c.l.b16 %v452
    %v783 = vunpack.c.h.b16 %v452
    %v784 = vunpack.c.l.b16 %v453
    %v785 = vunpack.c.h.b16 %v453
    %v786 = vunpack.c.l.b16 %v454
    %v787 = vunpack.c.h.b16 %v454
    %v788 = vunpack.c.l.b16 %v455
    %v789 = vunpack.c.h.b16 %v455
    %v790 = vunpack.c.l.b16 %v456
    %v791 = vunpack.c.h.b16 %v456
    %v792 = vunpack.c.l.b16 %v457
    %v793 = vunpack.c.h.b16 %v457
    %v794 = vunpack.c.l.b16 %v458
    %v795 = vunpack.c.h.b16 %v458
    %v796 = vunpack.c.l.b16 %v459
    %v797 = vunpack.c.h.b16 %v459
    %v798 = vunpack.c.l.b16 %v460
    %v799 = vunpack.c.h.b16 %v460
    %v800 = vunpack.c.l.b16 %v461
    %v801 = vunpack.c.h.b16 %v461
    %v802 = vunpack.c.l.b16 %v462
    %v803 = vunpack.c.h.b16 %v462
    %v804 = vunpack.c.l.b16 %v463
    %v805 = vunpack.c.h.b16 %v463
    %v806 = vunpack.c.l.b16 %v464
    %v807 = vunpack.c.h.b16 %v464
    %v808 = vunpack.c.l.b16 %v465
    %v809 = vunpack.c.h.b16 %v465
    %v810 = vunpack.c.l.b16 %v466
    %v811 = vunpack.c.h.b16 %v466
    %v812 = vunpack.c.l.b16 %v467
    %v813 = vunpack.c.h.b16 %v467
    %v814 = vunpack.c.l.b16 %v468
    %v815 = vunpack.c.h.b16 %v468
    %v816 = vunpack.c.l.b16 %v469
    %v817 = vunpack.c.h.b16 %v469
    %v818 = vunpack.c.l.b16 %v470
    %v819 = vunpack.c.h.b16 %v470
    %v820 = vunpack.c.l.b16 %v471
    %v821 = vunpack.c.h.b16 %v471
    %v822 = vunpack.c.l.b16 %v472
    %v823 = vunpack.c.h.b16 %v472
    %v824 = vunpack.c.l.b16 %v473
    %v825 = vunpack.c.h.b16 %v473
    %v826 = vunpack.c.l.b16 %v474
    %v827 = vunpack.c.h.b16 %v474
    %v828 = vunpack.c.l.b16 %v475
    %v829 = vunpack.c.h.b16 %v475
    %v830 = vunpack.c.l.b16 %v476
    %v831 = vunpack.c.h.b16 %v476
    %v832 = vunpack.c.l.b16 %v477
    %v833 = vunpack.c.h.b16 %v477
    %v834 = vunpack.c.l.b16 %v478
    %v835 = vunpack.c.h.b16 %v478
    %v836 = vunpack.c.l.b16 %v479
    %v837 = vunpack.c.h.b16 %v479
    %v838 = vunpack.c.l.b16 %v480
    %v839 = vunpack.c.h.b16 %v480
    %v840 = vunpack.c.l.b16 %v481
    %v841 = vunpack.c.h.b16 %v481
    %v842 = vunpack.c.l.b16 %v482
    %v843 = vunpack.c.h.b16 %v482
    %v844 = vunpack.c.l.b16 %v483
    %v845 = vunpack.c.h.b16 %v483
    %v846 = vunpack.c.l.b16 %v484
    %v847 = vunpack.c.h.b16 %v484
    %v848 = vunpack.c.l.b16 %v485
    %v849 = vunpack.c.h.b16 %v485
    %v850 = vunpack.c.l.b16 %v486
    %v851 = vunpack.c.h.b16 %v486
    %v852 = vunpack.c.l.b16 %v487
    %v853 = vunpack.c.h.b16 %v487
    %v854 = vunpack.c.l.b16 %v488
    %v855 = vunpack.c.h.b16 %v488
    %v856 = vunpack.c.l.b16 %v489
    %v857 = vunpack.c.h.b16 %v489
    %v858 = vunpack.c.l.b16 %v490
    %v859 = vunpack.c.h.b16 %v490
    %v860 = vunpack.c.l.b16 %v491
    %v861 = vunpack.c.h.b16 %v491
    %v862 = vunpack.c.l.b16 %v492
    %v863 = vunpack.c.h.b16 %v492
    %v864 = vunpack.c.l.b16 %v493
    %v865 = vunpack.c.h.b16 %v493
    %v866 = vunpack.c.l.b16 %v494
    %v867 = vunpack.c.h.b16 %v494
    %v868 = vunpack.c.l.b16 %v495
    %v869 = vunpack.c.h.b16 %v495
    %v870 = vunpack.c.l.b16 %v496
    %v871 = vunpack.c.h.b16 %v496
    %v872 = vunpack.c.l.b16 %v497
    %v873 = vunpack.c.h.b16 %v497
    %v874 = vunpack.c.l.b16 %v498
    %v875 = vunpack.c.h.b16 %v498
    %v876 = vunpack.c.l.b16 %v499
    %v877 = vunpack.c.h.b16 %v499
    %v878 = vunpack.c.l.b16 %v500
    %v879 = vunpack.c.h.b16 %v500
    %v880 = vunpack.c.l.b16 %v501
    %v881 = vunpack.c.h.b16 %v501
    %v882 = vunpack.c.l.b16 %v502
    %v883 = vunpack.c.h.b16 %v502
    %v884 = vunpack.c.l.b16 %v503
    %v885 = vunpack.c.h.b16 %v503
    %v886 = vunpack.c.l.b16 %v504
    %v887 = vunpack.c.h.b16 %v504
    %v888 = vunpack.c.l.b16 %v505
    %v889 = vunpack.c.h.b16 %v505
    %v890 = vunpack.c.l.b16 %v506
    %v891 = vunpack.c.h.b16 %v506
    %v892 = vunpack.c.l.b16 %v507
    %v893 = vunpack.c.h.b16 %v507
    %v894 = vunpack.c.l.b16 %v508
    %v895 = vunpack.c.h.b16 %v508
    %v896 = vunpack.c.l.b16 %v509
    %v897 = vunpack.c.h.b16 %v509
    %v898 = vunpack.c.l.b16 %v510
    %v899 = vunpack.c.h.b16 %v510
    %v900 = vunpack.c.l.b16 %v511
    %v901 = vunpack.c.h.b16 %v511
    %v902 = vunpack.c.l.b16 %v512
    %v903 = vunpack.c.h.b16 %v512
    %v904 = vunpack.c.l.b16 %v513
    %v905 = vunpack.c.h.b16 %v513
    %v906 = vunpack.c.l.b16 %v514
    %v907 = vunpack.c.h.b16 %v514
    %v908 = vunpack.c.l.b16 %v515
    %v909 = vunpack.c.h.b16 %v515
    %v910 = vpack.c.b16 %v658, %v654
    %v911 = vpack.c.b16 %v659, %v655
    %v912 = vpack.c.b16 %v660, %v656
    %v913 = vpack.c.b16 %v661, %v657
    %v914 = vpack.c.b16 %v666, %v662
    %v915 = vpack.c.b16 %v667, %v663
    %v916 = vpack.c.b16 %v668, %v664
    %v917 = vpack.c.b16 %v669, %v665
    %v918 = vpack.c.b16 %v674, %v670
    %v919 = vpack.c.b16 %v675, %v671
    %v920 = vpack.c.b16 %v676, %v672
    %v921 = vpack.c.b16 %v677, %v673
    %v922 = vpack.c.b16 %v682, %v678
    %v923 = vpack.c.b16 %v683, %v679
    %v924 = vpack.c.b16 %v684, %v680
    %v925 = vpack.c.b16 %v685, %v681
    %v926 = vpack.c.b16 %v690, %v686
    %v927 = vpack.c.b16 %v691, %v687
    %v928 = vpack.c.b16 %v692, %v688
    %v929 = vpack.c.b16 %v693, %v689
    %v930 = vpack.c.b16 %v698, %v694
    %v931 = vpack.c.b16 %v699, %v695
    %v932 = vpack.c.b16 %v700, %v696
    %v933 = vpack.c.b16 %v701, %v697
    %v934 = vpack.c.b16 %v706, %v702
    %v935 = vpack.c.b16 %v707, %v703
    %v936 = vpack.c.b16 %v708, %v704
    %v937 = vpack.c.b16 %v709, %v705
    %v938 = vpack.c.b16 %v714, %v710
    %v939 = vpack.c.b16 %v715, %v711
    %v940 = vpack.c.b16 %v716, %v712
    %v941 = vpack.c.b16 %v717, %v713
    %v942 = vpack.c.b16 %v722, %v718
    %v943 = vpack.c.b16 %v723, %v719
    %v944 = vpack.c.b16 %v724, %v720
    %v945 = vpack.c.b16 %v725, %v721
    %v946 = vpack.c.b16 %v730, %v726
    %v947 = vpack.c.b16 %v731, %v727
    %v948 = vpack.c.b16 %v732, %v728
    %v949 = vpack.c.b16 %v733, %v729
    %v950 = vpack.c.b16 %v738, %v734
    %v951 = vpack.c.b16 %v739, %v735
    %v952 = vpack.c.b16 %v740, %v736
    %v953 = vpack.c.b16 %v741, %v737
    %v954 = vpack.c.b16 %v746, %v742
    %v955 = vpack.c.b16 %v747, %v743
    %v956 = vpack.c.b16 %v748, %v744
    %v957 = vpack.c.b16 %v749, %v745
    %v958 = vpack.c.b16 %v754, %v750
    %v959 = vpack.c.b16 %v755, %v751
    %v960 = vpack.c.b16 %v756, %v752
    %v961 = vpack.c.b16 %v757, %v753
    %v962 = vpack.c.b16 %v762, %v758
    %v963 = vpack.c.b16 %v763, %v759
    %v964 = vpack.c.b16 %v764, %v760
    %v965 = vpack.c.b16 %v765, %v761
    %v966 = vpack.c.b16 %v770, %v766
    %v967 = vpack.c.b16 %v771, %v767
    %v968 = vpack.c.b16 %v772, %v768
    %v969 = vpack.c.b16 %v773, %v769
    %v970 = vpack.c.b16 %v778, %v774
    %v971 = vpack.c.b16 %v779, %v775
    %v972 = vpack.c.b16 %v780, %v776
    %v973 = vpack.c.b16 %v781, %v777
    %v974 = vpack.c.b16 %v786, %v782
    %v975 = vpack.c.b16 %v787, %v783
    %v976 = vpack.c.b16 %v788, %v784
    %v977 = vpack.c.b16 %v789, %v785
    %v978 = vpack.c.b16 %v794, %v790
    %v979 = vpack.c.b16 %v795, %v791
    %v980 = vpack.c.b16 %v796, %v792
    %v981 = vpack.c.b16 %v797, %v793
    %v982 = vpack.c.b16 %v802, %v798
    %v983 = vpack.c.b16 %v803, %v799
    %v984 = vpack.c.b16 %v804, %v800
    %v985 = vpack.c.b16 %v805, %v801
    %v986 = vpack.c.b16 %v810, %v806
    %v987 = vpack.c.b16 %v811, %v807
    %v988 = vpack.c.b16 %v812, %v808
    %v989 = vpack.c.b16 %v813, %v809
    %v990 = vpack.c.b16 %v818, %v814
    %v991 = vpack.c.b16 %v819, %v815
    %v992 = vpack.c.b16 %v820, %v816
    %v993 = vpack.c.b16 %v821, %v817
    %v994 = vpack.c.b16 %v826, %v822
    %v995 = vpack.c.b16 %v827, %v823
    %v996 = vpack.c.b16 %v828, %v824
    %v997 = vpack.c.b16 %v829, %v825
    %v998 = vpack.c.b16 %v834, %v830
    %v999 = vpack.c.b16 %v835, %v831
    %v1000 = vpack.c.b16 %v836, %v832
    %v1001 = vpack.c.b16 %v837, %v833
    %v1002 = vpack.c.b16 %v842, %v838
    %v1003 = vpack.c.b16 %v843, %v839
    %v1004 = vpack.c.b16 %v844, %v840
    %v1005 = vpack.c.b16 %v845, %v841
    %v1006 = vpack.c.b16 %v850, %v846
    %v1007 = vpack.c.b16 %v851, %v847
    %v1008 = vpack.c.b16 %v852, %v848
    %v1009 = vpack.c.b16 %v853, %v849
    %v1010 = vpack.c.b16 %v858, %v854
    %v1011 = vpack.c.b16 %v859, %v855
    %v1012 = vpack.c.b16 %v860, %v856
    %v1013 = vpack.c.b16 %v861, %v857
    %v1014 = vpack.c.b16 %v866, %v862
    %v1015 = vpack.c.b16 %v867, %v863
    %v1016 = vpack.c.b16 %v868, %v864
    %v1017 = vpack.c.b16 %v869, %v865
    %v1018 = vpack.c.b16 %v874, %v870
    %v1019 = vpack.c.b16 %v875, %v871
    %v1020 = vpack.c.b16 %v876, %v872
    %v1021 = vpack.c.b16 %v877, %v873
    %v1022 = vpack.c.b16 %v882, %v878
    %v1023 = vpack.c.b16 %v883, %v879
    %v1024 = vpack.c.b16 %v884, %v880
    %v1025 = vpack.c.b16 %v885, %v881
    %v1026 = vpack.c.b16 %v890, %v886
    %v1027 = vpack.c.b16 %v891, %v887
    %v1028 = vpack.c.b16 %v892, %v888
    %v1029 = vpack.c.b16 %v893, %v889
    %v1030 = vpack.c.b16 %v898, %v894
    %v1031 = vpack.c.b16 %v899, %v895
    %v1032 = vpack.c.b16 %v900, %v896
    %v1033 = vpack.c.b16 %v901, %v897
    %v1034 = vpack.c.b16 %v906, %v902
    %v1035 = vpack.c.b16 %v907, %v903
    %v1036 = vpack.c.b16 %v908, %v904
    %v1037 = vpack.c.b16 %v909, %v905
    %1166 = vmatpush.bf16.msra.mxu0 %v938
    %1167 = vmatpush.bf16.msra.mxu0 %v934
    %1168 = vmatpush.bf16.msra.mxu0 %v930
    %1169 = vmatpush.bf16.msra.mxu0 %v926
    %1170 = vmatpush.bf16.msra.mxu0 %v922
    %1171 = vmatpush.bf16.msra.mxu0 %v918
    %1172 = vmatpush.bf16.msra.mxu0 %v914
    %1173 = vmatpush.bf16.msra.mxu0 %v910
    %1174 = vmatmul.bf16.gmra.mxu0 %v384
    %v1175 = vpop.f32.mrf.mxu0
    %v1176 = vadd.f32 %v518, %v1175
    %v1177 = vpop.f32.mrf.mxu0
    %v1178 = vadd.f32 %v518, %v1177
    %1179 = vdwg.mxu0
    %1180 = vmatpush.bf16.msra.mxu0 %v970
    %1181 = vmatpush.bf16.msra.mxu0 %v966
    %1182 = vmatpush.bf16.msra.mxu0 %v962
    %1183 = vmatpush.bf16.msra.mxu0 %v958
    %1184 = vmatpush.bf16.msra.mxu0 %v954
    %1185 = vmatpush.bf16.msra.mxu0 %v950
    %1186 = vmatpush.bf16.msra.mxu0 %v946
    %1187 = vmatpush.bf16.msra.mxu0 %v942
    %1188 = vmatmul.bf16.gmra.mxu0 %v385
    %v1189 = vpop.f32.mrf.mxu0
    %v1190 = vadd.f32 %v1176, %v1189
    %v1191 = vpop.f32.mrf.mxu0
    %v1192 = vadd.f32 %v1178, %v1191
    %1193 = vdwg.mxu0
    %1194 = vmatpush.bf16.msra.mxu0 %v1002
    %1195 = vmatpush.bf16.msra.mxu0 %v998
    %1196 = vmatpush.bf16.msra.mxu0 %v994
    %1197 = vmatpush.bf16.msra.mxu0 %v990
    %1198 = vmatpush.bf16.msra.mxu0 %v986
    %1199 = vmatpush.bf16.msra.mxu0 %v982
    %1200 = vmatpush.bf16.msra.mxu0 %v978
    %1201 = vmatpush.bf16.msra.mxu0 %v974
    %1202 = vmatmul.bf16.gmra.mxu0 %v386
    %v1203 = vpop.f32.mrf.mxu0
    %v1204 = vadd.f32 %v1190, %v1203
    %v1205 = vpop.f32.mrf.mxu0
    %v1206 = vadd.f32 %v1192, %v1205
    %1207 = vdwg.mxu0
    %1208 = vmatpush.bf16.msra.mxu0 %v1034
    %1209 = vmatpush.bf16.msra.mxu0 %v1030
    %1210 = vmatpush.bf16.msra.mxu0 %v1026
    %1211 = vmatpush.bf16.msra.mxu0 %v1022
    %1212 = vmatpush.bf16.msra.mxu0 %v1018
    %1213 = vmatpush.bf16.msra.mxu0 %v1014
    %1214 = vmatpush.bf16.msra.mxu0 %v1010
    %1215 = vmatpush.bf16.msra.mxu0 %v1006
    %1216 = vmatmul.bf16.gmra.mxu0 %v387
    %v1217 = vpop.f32.mrf.mxu0
    %v1218 = vadd.f32 %v1204, %v1217
    %v1219 = vpop.f32.mrf.mxu0
    %v1220 = vadd.f32 %v1206, %v1219
    %1221 = vdwg.mxu0
    %1222 = vmatpush.bf16.msra.mxu0 %v939
    %1223 = vmatpush.bf16.msra.mxu0 %v935
    %1224 = vmatpush.bf16.msra.mxu0 %v931
    %1225 = vmatpush.bf16.msra.mxu0 %v927
    %1226 = vmatpush.bf16.msra.mxu0 %v923
    %1227 = vmatpush.bf16.msra.mxu0 %v919
    %1228 = vmatpush.bf16.msra.mxu0 %v915
    %1229 = vmatpush.bf16.msra.mxu0 %v911
    %1230 = vmatmul.bf16.gmra.mxu0 %v384
    %v1231 = vpop.f32.mrf.mxu0
    %v1232 = vadd.f32 %v519, %v1231
    %v1233 = vpop.f32.mrf.mxu0
    %v1234 = vadd.f32 %v519, %v1233
    %1235 = vdwg.mxu0
    %1236 = vmatpush.bf16.msra.mxu0 %v971
    %1237 = vmatpush.bf16.msra.mxu0 %v967
    %1238 = vmatpush.bf16.msra.mxu0 %v963
    %1239 = vmatpush.bf16.msra.mxu0 %v959
    %1240 = vmatpush.bf16.msra.mxu0 %v955
    %1241 = vmatpush.bf16.msra.mxu0 %v951
    %1242 = vmatpush.bf16.msra.mxu0 %v947
    %1243 = vmatpush.bf16.msra.mxu0 %v943
    %1244 = vmatmul.bf16.gmra.mxu0 %v385
    %v1245 = vpop.f32.mrf.mxu0
    %v1246 = vadd.f32 %v1232, %v1245
    %v1247 = vpop.f32.mrf.mxu0
    %v1248 = vadd.f32 %v1234, %v1247
    %1249 = vdwg.mxu0
    %1250 = vmatpush.bf16.msra.mxu0 %v1003
    %1251 = vmatpush.bf16.msra.mxu0 %v999
    %1252 = vmatpush.bf16.msra.mxu0 %v995
    %1253 = vmatpush.bf16.msra.mxu0 %v991
    %1254 = vmatpush.bf16.msra.mxu0 %v987
    %1255 = vmatpush.bf16.msra.mxu0 %v983
    %1256 = vmatpush.bf16.msra.mxu0 %v979
    %1257 = vmatpush.bf16.msra.mxu0 %v975
    %1258 = vmatmul.bf16.gmra.mxu0 %v386
    %v1259 = vpop.f32.mrf.mxu0
    %v1260 = vadd.f32 %v1246, %v1259
    %v1261 = vpop.f32.mrf.mxu0
    %v1262 = vadd.f32 %v1248, %v1261
    %1263 = vdwg.mxu0
    %1264 = vmatpush.bf16.msra.mxu0 %v1035
    %1265 = vmatpush.bf16.msra.mxu0 %v1031
    %1266 = vmatpush.bf16.msra.mxu0 %v1027
    %1267 = vmatpush.bf16.msra.mxu0 %v1023
    %1268 = vmatpush.bf16.msra.mxu0 %v1019
    %1269 = vmatpush.bf16.msra.mxu0 %v1015
    %1270 = vmatpush.bf16.msra.mxu0 %v1011
    %1271 = vmatpush.bf16.msra.mxu0 %v1007
    %1272 = vmatmul.bf16.gmra.mxu0 %v387
    %v1273 = vpop.f32.mrf.mxu0
    %v1274 = vadd.f32 %v1260, %v1273
    %v1275 = vpop.f32.mrf.mxu0
    %v1276 = vadd.f32 %v1262, %v1275
    %1277 = vdwg.mxu0
    %1278 = vmatpush.bf16.msra.mxu0 %v940
    %1279 = vmatpush.bf16.msra.mxu0 %v936
    %1280 = vmatpush.bf16.msra.mxu0 %v932
    %1281 = vmatpush.bf16.msra.mxu0 %v928
    %1282 = vmatpush.bf16.msra.mxu0 %v924
    %1283 = vmatpush.bf16.msra.mxu0 %v920
    %1284 = vmatpush.bf16.msra.mxu0 %v916
    %1285 = vmatpush.bf16.msra.mxu0 %v912
    %1286 = vmatmul.bf16.gmra.mxu0 %v384
    %v1287 = vpop.f32.mrf.mxu0
    %v1288 = vadd.f32 %v520, %v1287
    %v1289 = vpop.f32.mrf.mxu0
    %v1290 = vadd.f32 %v520, %v1289
    %1291 = vdwg.mxu0
    %1292 = vmatpush.bf16.msra.mxu0 %v972
    %1293 = vmatpush.bf16.msra.mxu0 %v968
    %1294 = vmatpush.bf16.msra.mxu0 %v964
    %1295 = vmatpush.bf16.msra.mxu0 %v960
    %1296 = vmatpush.bf16.msra.mxu0 %v956
    %1297 = vmatpush.bf16.msra.mxu0 %v952
    %1298 = vmatpush.bf16.msra.mxu0 %v948
    %1299 = vmatpush.bf16.msra.mxu0 %v944
    %1300 = vmatmul.bf16.gmra.mxu0 %v385
    %v1301 = vpop.f32.mrf.mxu0
    %v1302 = vadd.f32 %v1288, %v1301
    %v1303 = vpop.f32.mrf.mxu0
    %v1304 = vadd.f32 %v1290, %v1303
    %1305 = vdwg.mxu0
    %1306 = vmatpush.bf16.msra.mxu0 %v1004
    %1307 = vmatpush.bf16.msra.mxu0 %v1000
    %1308 = vmatpush.bf16.msra.mxu0 %v996
    %1309 = vmatpush.bf16.msra.mxu0 %v992
    %1310 = vmatpush.bf16.msra.mxu0 %v988
    %1311 = vmatpush.bf16.msra.mxu0 %v984
    %1312 = vmatpush.bf16.msra.mxu0 %v980
    %1313 = vmatpush.bf16.msra.mxu0 %v976
    %1314 = vmatmul.bf16.gmra.mxu0 %v386
    %v1315 = vpop.f32.mrf.mxu0
    %v1316 = vadd.f32 %v1302, %v1315
    %v1317 = vpop.f32.mrf.mxu0
    %v1318 = vadd.f32 %v1304, %v1317
    %1319 = vdwg.mxu0
    %1320 = vmatpush.bf16.msra.mxu0 %v1036
    %1321 = vmatpush.bf16.msra.mxu0 %v1032
    %1322 = vmatpush.bf16.msra.mxu0 %v1028
    %1323 = vmatpush.bf16.msra.mxu0 %v1024
    %1324 = vmatpush.bf16.msra.mxu0 %v1020
    %1325 = vmatpush.bf16.msra.mxu0 %v1016
    %1326 = vmatpush.bf16.msra.mxu0 %v1012
    %1327 = vmatpush.bf16.msra.mxu0 %v1008
    %1328 = vmatmul.bf16.gmra.mxu0 %v387
    %v1329 = vpop.f32.mrf.mxu0
    %v1330 = vadd.f32 %v1316, %v1329
    %v1331 = vpop.f32.mrf.mxu0
    %v1332 = vadd.f32 %v1318, %v1331
    %1333 = vdwg.mxu0
    %1334 = vmatpush.bf16.msra.mxu0 %v941
    %1335 = vmatpush.bf16.msra.mxu0 %v937
    %1336 = vmatpush.bf16.msra.mxu0 %v933
    %1337 = vmatpush.bf16.msra.mxu0 %v929
    %1338 = vmatpush.bf16.msra.mxu0 %v925
    %1339 = vmatpush.bf16.msra.mxu0 %v921
    %1340 = vmatpush.bf16.msra.mxu0 %v917
    %1341 = vmatpush.bf16.msra.mxu0 %v913
    %1342 = vmatmul.bf16.gmra.mxu0 %v384
    %v1343 = vpop.f32.mrf.mxu0
    %v1344 = vadd.f32 %v521, %v1343
    %v1345 = vpop.f32.mrf.mxu0
    %v1346 = vadd.f32 %v521, %v1345
    %1347 = vdwg.mxu0
    %1348 = vmatpush.bf16.msra.mxu0 %v973
    %1349 = vmatpush.bf16.msra.mxu0 %v969
    %1350 = vmatpush.bf16.msra.mxu0 %v965
    %1351 = vmatpush.bf16.msra.mxu0 %v961
    %1352 = vmatpush.bf16.msra.mxu0 %v957
    %1353 = vmatpush.bf16.msra.mxu0 %v953
    %1354 = vmatpush.bf16.msra.mxu0 %v949
    %1355 = vmatpush.bf16.msra.mxu0 %v945
    %1356 = vmatmul.bf16.gmra.mxu0 %v385
    %v1357 = vpop.f32.mrf.mxu0
    %v1358 = vadd.f32 %v1344, %v1357
    %v1359 = vpop.f32.mrf.mxu0
    %v1360 = vadd.f32 %v1346, %v1359
    %1361 = vdwg.mxu0
    %1362 = vmatpush.bf16.msra.mxu0 %v1005
    %1363 = vmatpush.bf16.msra.mxu0 %v1001
    %1364 = vmatpush.bf16.msra.mxu0 %v997
    %1365 = vmatpush.bf16.msra.mxu0 %v993
    %1366 = vmatpush.bf16.msra.mxu0 %v989
    %1367 = vmatpush.bf16.msra.mxu0 %v985
    %1368 = vmatpush.bf16.msra.mxu0 %v981
    %1369 = vmatpush.bf16.msra.mxu0 %v977
    %1370 = vmatmul.bf16.gmra.mxu0 %v386
    %v1371 = vpop.f32.mrf.mxu0
    %v1372 = vadd.f32 %v1358, %v1371
    %v1373 = vpop.f32.mrf.mxu0
    %v1374 = vadd.f32 %v1360, %v1373
    %1375 = vdwg.mxu0
    %1376 = vmatpush.bf16.msra.mxu0 %v1037
    %1377 = vmatpush.bf16.msra.mxu0 %v1033
    %1378 = vmatpush.bf16.msra.mxu0 %v1029
    %1379 = vmatpush.bf16.msra.mxu0 %v1025
    %1380 = vmatpush.bf16.msra.mxu0 %v1021
    %1381 = vmatpush.bf16.msra.mxu0 %v1017
    %1382 = vmatpush.bf16.msra.mxu0 %v1013
    %1383 = vmatpush.bf16.msra.mxu0 %v1009
    %1384 = vmatmul.bf16.gmra.mxu0 %v387
    %v1385 = vpop.f32.mrf.mxu0
    %v1386 = vadd.f32 %v1372, %v1385
    %v1387 = vpop.f32.mrf.mxu0
    %v1388 = vadd.f32 %v1374, %v1387
    %1389 = vdwg.mxu0
    %v1390 = vmax.f32 %v1218, 0.0
    %v1391 = vmax.f32 %v1274, 0.0
    %v1392 = vmax.f32 %v1330, 0.0
    %v1393 = vmax.f32 %v1386, 0.0
    %v1394 = vmax.f32 %v1220, 0.0
    %v1395 = vmax.f32 %v1276, 0.0
    %v1396 = vmax.f32 %v1332, 0.0
    %v1397 = vmax.f32 %v1388, 0.0
    %v1398 = vpack.c.bf16 %v1394, %v1390
    %v1399 = vpack.c.bf16 %v1395, %v1391
    %v1400 = vpack.c.bf16 %v1396, %v1392
    %v1401 = vpack.c.bf16 %v1397, %v1393
    %v1402 = vld [vmem:[#allocation8] sm:$0xff]
    %v1403 = vld [vmem:[#allocation8 + $0x8] sm:$0xff]
    %v1404 = vld [vmem:[#allocation8 + $0x10] sm:$0xff]
    %v1405 = vld [vmem:[#allocation8 + $0x18] sm:$0xff]
    %v1406 = vld [vmem:[#allocation8 + $0x20] sm:$0xff]
    %v1407 = vld [vmem:[#allocation8 + $0x28] sm:$0xff]
    %v1408 = vld [vmem:[#allocation8 + $0x30] sm:$0xff]
    %v1409 = vld [vmem:[#allocation8 + $0x38] sm:$0xff]
    %v1410 = vld [vmem:[#allocation8 + $0x40] sm:$0xff]
    %v1411 = vld [vmem:[#allocation8 + $0x48] sm:$0xff]
    %v1412 = vld [vmem:[#allocation8 + $0x50] sm:$0xff]
    %v1413 = vld [vmem:[#allocation8 + $0x58] sm:$0xff]
    %v1414 = vld [vmem:[#allocation8 + $0x60] sm:$0xff]
    %v1415 = vld [vmem:[#allocation8 + $0x68] sm:$0xff]
    %v1416 = vld [vmem:[#allocation8 + $0x70] sm:$0xff]
    %v1417 = vld [vmem:[#allocation8 + $0x78] sm:$0xff]
    %v1418 = vld [vmem:[#allocation8 + $0x80] sm:$0xff]
    %v1419 = vld [vmem:[#allocation8 + $0x88] sm:$0xff]
    %v1420 = vld [vmem:[#allocation8 + $0x90] sm:$0xff]
    %v1421 = vld [vmem:[#allocation8 + $0x98] sm:$0xff]
    %v1422 = vld [vmem:[#allocation8 + $0xa0] sm:$0xff]
    %v1423 = vld [vmem:[#allocation8 + $0xa8] sm:$0xff]
    %v1424 = vld [vmem:[#allocation8 + $0xb0] sm:$0xff]
    %v1425 = vld [vmem:[#allocation8 + $0xb8] sm:$0xff]
    %v1426 = vld [vmem:[#allocation8 + $0xc0] sm:$0xff]
    %v1427 = vld [vmem:[#allocation8 + $0xc8] sm:$0xff]
    %v1428 = vld [vmem:[#allocation8 + $0xd0] sm:$0xff]
    %v1429 = vld [vmem:[#allocation8 + $0xd8] sm:$0xff]
    %v1430 = vld [vmem:[#allocation8 + $0xe0] sm:$0xff]
    %v1431 = vld [vmem:[#allocation8 + $0xe8] sm:$0xff]
    %v1432 = vld [vmem:[#allocation8 + $0xf0] sm:$0xff]
    %v1433 = vld [vmem:[#allocation8 + $0xf8] sm:$0xff]
    %v1434 = vld [vmem:[#allocation8 + $0x100] sm:$0xff]
    %v1435 = vld [vmem:[#allocation8 + $0x108] sm:$0xff]
    %v1436 = vld [vmem:[#allocation8 + $0x110] sm:$0xff]
    %v1437 = vld [vmem:[#allocation8 + $0x118] sm:$0xff]
    %v1438 = vld [vmem:[#allocation8 + $0x120] sm:$0xff]
    %v1439 = vld [vmem:[#allocation8 + $0x128] sm:$0xff]
    %v1440 = vld [vmem:[#allocation8 + $0x130] sm:$0xff]
    %v1441 = vld [vmem:[#allocation8 + $0x138] sm:$0xff]
    %v1442 = vld [vmem:[#allocation8 + $0x140] sm:$0xff]
    %v1443 = vld [vmem:[#allocation8 + $0x148] sm:$0xff]
    %v1444 = vld [vmem:[#allocation8 + $0x150] sm:$0xff]
    %v1445 = vld [vmem:[#allocation8 + $0x158] sm:$0xff]
    %v1446 = vld [vmem:[#allocation8 + $0x160] sm:$0xff]
    %v1447 = vld [vmem:[#allocation8 + $0x168] sm:$0xff]
    %v1448 = vld [vmem:[#allocation8 + $0x170] sm:$0xff]
    %v1449 = vld [vmem:[#allocation8 + $0x178] sm:$0xff]
    %v1450 = vld [vmem:[#allocation8 + $0x180] sm:$0xff]
    %v1451 = vld [vmem:[#allocation8 + $0x188] sm:$0xff]
    %v1452 = vld [vmem:[#allocation8 + $0x190] sm:$0xff]
    %v1453 = vld [vmem:[#allocation8 + $0x198] sm:$0xff]
    %v1454 = vld [vmem:[#allocation8 + $0x1a0] sm:$0xff]
    %v1455 = vld [vmem:[#allocation8 + $0x1a8] sm:$0xff]
    %v1456 = vld [vmem:[#allocation8 + $0x1b0] sm:$0xff]
    %v1457 = vld [vmem:[#allocation8 + $0x1b8] sm:$0xff]
    %v1458 = vld [vmem:[#allocation8 + $0x1c0] sm:$0xff]
    %v1459 = vld [vmem:[#allocation8 + $0x1c8] sm:$0xff]
    %v1460 = vld [vmem:[#allocation8 + $0x1d0] sm:$0xff]
    %v1461 = vld [vmem:[#allocation8 + $0x1d8] sm:$0xff]
    %v1462 = vld [vmem:[#allocation8 + $0x1e0] sm:$0xff]
    %v1463 = vld [vmem:[#allocation8 + $0x1e8] sm:$0xff]
    %v1464 = vld [vmem:[#allocation8 + $0x1f0] sm:$0xff]
    %v1465 = vld [vmem:[#allocation8 + $0x1f8] sm:$0xff]
    %v1466 = vld [vmem:[#allocation8 + $0x200] sm:$0xff]
    %v1467 = vld [vmem:[#allocation8 + $0x208] sm:$0xff]
    %v1468 = vld [vmem:[#allocation8 + $0x210] sm:$0xff]
    %v1469 = vld [vmem:[#allocation8 + $0x218] sm:$0xff]
    %v1470 = vld [vmem:[#allocation8 + $0x220] sm:$0xff]
    %v1471 = vld [vmem:[#allocation8 + $0x228] sm:$0xff]
    %v1472 = vld [vmem:[#allocation8 + $0x230] sm:$0xff]
    %v1473 = vld [vmem:[#allocation8 + $0x238] sm:$0xff]
    %v1474 = vld [vmem:[#allocation8 + $0x240] sm:$0xff]
    %v1475 = vld [vmem:[#allocation8 + $0x248] sm:$0xff]
    %v1476 = vld [vmem:[#allocation8 + $0x250] sm:$0xff]
    %v1477 = vld [vmem:[#allocation8 + $0x258] sm:$0xff]
    %v1478 = vld [vmem:[#allocation8 + $0x260] sm:$0xff]
    %v1479 = vld [vmem:[#allocation8 + $0x268] sm:$0xff]
    %v1480 = vld [vmem:[#allocation8 + $0x270] sm:$0xff]
    %v1481 = vld [vmem:[#allocation8 + $0x278] sm:$0xff]
    %v1482 = vld [vmem:[#allocation8 + $0x280] sm:$0xff]
    %v1483 = vld [vmem:[#allocation8 + $0x288] sm:$0xff]
    %v1484 = vld [vmem:[#allocation8 + $0x290] sm:$0xff]
    %v1485 = vld [vmem:[#allocation8 + $0x298] sm:$0xff]
    %v1486 = vld [vmem:[#allocation8 + $0x2a0] sm:$0xff]
    %v1487 = vld [vmem:[#allocation8 + $0x2a8] sm:$0xff]
    %v1488 = vld [vmem:[#allocation8 + $0x2b0] sm:$0xff]
    %v1489 = vld [vmem:[#allocation8 + $0x2b8] sm:$0xff]
    %v1490 = vld [vmem:[#allocation8 + $0x2c0] sm:$0xff]
    %v1491 = vld [vmem:[#allocation8 + $0x2c8] sm:$0xff]
    %v1492 = vld [vmem:[#allocation8 + $0x2d0] sm:$0xff]
    %v1493 = vld [vmem:[#allocation8 + $0x2d8] sm:$0xff]
    %v1494 = vld [vmem:[#allocation8 + $0x2e0] sm:$0xff]
    %v1495 = vld [vmem:[#allocation8 + $0x2e8] sm:$0xff]
    %v1496 = vld [vmem:[#allocation8 + $0x2f0] sm:$0xff]
    %v1497 = vld [vmem:[#allocation8 + $0x2f8] sm:$0xff]
    %v1498 = vld [vmem:[#allocation8 + $0x300] sm:$0xff]
    %v1499 = vld [vmem:[#allocation8 + $0x308] sm:$0xff]
    %v1500 = vld [vmem:[#allocation8 + $0x310] sm:$0xff]
    %v1501 = vld [vmem:[#allocation8 + $0x318] sm:$0xff]
    %v1502 = vld [vmem:[#allocation8 + $0x320] sm:$0xff]
    %v1503 = vld [vmem:[#allocation8 + $0x328] sm:$0xff]
    %v1504 = vld [vmem:[#allocation8 + $0x330] sm:$0xff]
    %v1505 = vld [vmem:[#allocation8 + $0x338] sm:$0xff]
    %v1506 = vld [vmem:[#allocation8 + $0x340] sm:$0xff]
    %v1507 = vld [vmem:[#allocation8 + $0x348] sm:$0xff]
    %v1508 = vld [vmem:[#allocation8 + $0x350] sm:$0xff]
    %v1509 = vld [vmem:[#allocation8 + $0x358] sm:$0xff]
    %v1510 = vld [vmem:[#allocation8 + $0x360] sm:$0xff]
    %v1511 = vld [vmem:[#allocation8 + $0x368] sm:$0xff]
    %v1512 = vld [vmem:[#allocation8 + $0x370] sm:$0xff]
    %v1513 = vld [vmem:[#allocation8 + $0x378] sm:$0xff]
    %v1514 = vld [vmem:[#allocation8 + $0x380] sm:$0xff]
    %v1515 = vld [vmem:[#allocation8 + $0x388] sm:$0xff]
    %v1516 = vld [vmem:[#allocation8 + $0x390] sm:$0xff]
    %v1517 = vld [vmem:[#allocation8 + $0x398] sm:$0xff]
    %v1518 = vld [vmem:[#allocation8 + $0x3a0] sm:$0xff]
    %v1519 = vld [vmem:[#allocation8 + $0x3a8] sm:$0xff]
    %v1520 = vld [vmem:[#allocation8 + $0x3b0] sm:$0xff]
    %v1521 = vld [vmem:[#allocation8 + $0x3b8] sm:$0xff]
    %v1522 = vld [vmem:[#allocation8 + $0x3c0] sm:$0xff]
    %v1523 = vld [vmem:[#allocation8 + $0x3c8] sm:$0xff]
    %v1524 = vld [vmem:[#allocation8 + $0x3d0] sm:$0xff]
    %v1525 = vld [vmem:[#allocation8 + $0x3d8] sm:$0xff]
    %v1526 = vld [vmem:[#allocation8 + $0x3e0] sm:$0xff]
    %v1527 = vld [vmem:[#allocation8 + $0x3e8] sm:$0xff]
    %v1528 = vld [vmem:[#allocation8 + $0x3f0] sm:$0xff]
    %v1529 = vld [vmem:[#allocation8 + $0x3f8] sm:$0xff]
    %v1530 = vld [vmem:[#allocation10] sm:$0xf]
    %v1532 = vperm.slane %v1530, 0
    %v1533 = vperm.slane %v1530, 1
    %v1534 = vperm.slane %v1530, 2
    %v1535 = vperm.slane %v1530, 3
    %v1668 = vunpack.c.l.b16 %v1402
    %v1669 = vunpack.c.h.b16 %v1402
    %v1670 = vunpack.c.l.b16 %v1403
    %v1671 = vunpack.c.h.b16 %v1403
    %v1672 = vunpack.c.l.b16 %v1404
    %v1673 = vunpack.c.h.b16 %v1404
    %v1674 = vunpack.c.l.b16 %v1405
    %v1675 = vunpack.c.h.b16 %v1405
    %v1676 = vunpack.c.l.b16 %v1406
    %v1677 = vunpack.c.h.b16 %v1406
    %v1678 = vunpack.c.l.b16 %v1407
    %v1679 = vunpack.c.h.b16 %v1407
    %v1680 = vunpack.c.l.b16 %v1408
    %v1681 = vunpack.c.h.b16 %v1408
    %v1682 = vunpack.c.l.b16 %v1409
    %v1683 = vunpack.c.h.b16 %v1409
    %v1684 = vunpack.c.l.b16 %v1410
    %v1685 = vunpack.c.h.b16 %v1410
    %v1686 = vunpack.c.l.b16 %v1411
    %v1687 = vunpack.c.h.b16 %v1411
    %v1688 = vunpack.c.l.b16 %v1412
    %v1689 = vunpack.c.h.b16 %v1412
    %v1690 = vunpack.c.l.b16 %v1413
    %v1691 = vunpack.c.h.b16 %v1413
    %v1692 = vunpack.c.l.b16 %v1414
    %v1693 = vunpack.c.h.b16 %v1414
    %v1694 = vunpack.c.l.b16 %v1415
    %v1695 = vunpack.c.h.b16 %v1415
    %v1696 = vunpack.c.l.b16 %v1416
    %v1697 = vunpack.c.h.b16 %v1416
    %v1698 = vunpack.c.l.b16 %v1417
    %v1699 = vunpack.c.h.b16 %v1417
    %v1700 = vunpack.c.l.b16 %v1418
    %v1701 = vunpack.c.h.b16 %v1418
    %v1702 = vunpack.c.l.b16 %v1419
    %v1703 = vunpack.c.h.b16 %v1419
    %v1704 = vunpack.c.l.b16 %v1420
    %v1705 = vunpack.c.h.b16 %v1420
    %v1706 = vunpack.c.l.b16 %v1421
    %v1707 = vunpack.c.h.b16 %v1421
    %v1708 = vunpack.c.l.b16 %v1422
    %v1709 = vunpack.c.h.b16 %v1422
    %v1710 = vunpack.c.l.b16 %v1423
    %v1711 = vunpack.c.h.b16 %v1423
    %v1712 = vunpack.c.l.b16 %v1424
    %v1713 = vunpack.c.h.b16 %v1424
    %v1714 = vunpack.c.l.b16 %v1425
    %v1715 = vunpack.c.h.b16 %v1425
    %v1716 = vunpack.c.l.b16 %v1426
    %v1717 = vunpack.c.h.b16 %v1426
    %v1718 = vunpack.c.l.b16 %v1427
    %v1719 = vunpack.c.h.b16 %v1427
    %v1720 = vunpack.c.l.b16 %v1428
    %v1721 = vunpack.c.h.b16 %v1428
    %v1722 = vunpack.c.l.b16 %v1429
    %v1723 = vunpack.c.h.b16 %v1429
    %v1724 = vunpack.c.l.b16 %v1430
    %v1725 = vunpack.c.h.b16 %v1430
    %v1726 = vunpack.c.l.b16 %v1431
    %v1727 = vunpack.c.h.b16 %v1431
    %v1728 = vunpack.c.l.b16 %v1432
    %v1729 = vunpack.c.h.b16 %v1432
    %v1730 = vunpack.c.l.b16 %v1433
    %v1731 = vunpack.c.h.b16 %v1433
    %v1732 = vunpack.c.l.b16 %v1434
    %v1733 = vunpack.c.h.b16 %v1434
    %v1734 = vunpack.c.l.b16 %v1435
    %v1735 = vunpack.c.h.b16 %v1435
    %v1736 = vunpack.c.l.b16 %v1436
    %v1737 = vunpack.c.h.b16 %v1436
    %v1738 = vunpack.c.l.b16 %v1437
    %v1739 = vunpack.c.h.b16 %v1437
    %v1740 = vunpack.c.l.b16 %v1438
    %v1741 = vunpack.c.h.b16 %v1438
    %v1742 = vunpack.c.l.b16 %v1439
    %v1743 = vunpack.c.h.b16 %v1439
    %v1744 = vunpack.c.l.b16 %v1440
    %v1745 = vunpack.c.h.b16 %v1440
    %v1746 = vunpack.c.l.b16 %v1441
    %v1747 = vunpack.c.h.b16 %v1441
    %v1748 = vunpack.c.l.b16 %v1442
    %v1749 = vunpack.c.h.b16 %v1442
    %v1750 = vunpack.c.l.b16 %v1443
    %v1751 = vunpack.c.h.b16 %v1443
    %v1752 = vunpack.c.l.b16 %v1444
    %v1753 = vunpack.c.h.b16 %v1444
    %v1754 = vunpack.c.l.b16 %v1445
    %v1755 = vunpack.c.h.b16 %v1445
    %v1756 = vunpack.c.l.b16 %v1446
    %v1757 = vunpack.c.h.b16 %v1446
    %v1758 = vunpack.c.l.b16 %v1447
    %v1759 = vunpack.c.h.b16 %v1447
    %v1760 = vunpack.c.l.b16 %v1448
    %v1761 = vunpack.c.h.b16 %v1448
    %v1762 = vunpack.c.l.b16 %v1449
    %v1763 = vunpack.c.h.b16 %v1449
    %v1764 = vunpack.c.l.b16 %v1450
    %v1765 = vunpack.c.h.b16 %v1450
    %v1766 = vunpack.c.l.b16 %v1451
    %v1767 = vunpack.c.h.b16 %v1451
    %v1768 = vunpack.c.l.b16 %v1452
    %v1769 = vunpack.c.h.b16 %v1452
    %v1770 = vunpack.c.l.b16 %v1453
    %v1771 = vunpack.c.h.b16 %v1453
    %v1772 = vunpack.c.l.b16 %v1454
    %v1773 = vunpack.c.h.b16 %v1454
    %v1774 = vunpack.c.l.b16 %v1455
    %v1775 = vunpack.c.h.b16 %v1455
    %v1776 = vunpack.c.l.b16 %v1456
    %v1777 = vunpack.c.h.b16 %v1456
    %v1778 = vunpack.c.l.b16 %v1457
    %v1779 = vunpack.c.h.b16 %v1457
    %v1780 = vunpack.c.l.b16 %v1458
    %v1781 = vunpack.c.h.b16 %v1458
    %v1782 = vunpack.c.l.b16 %v1459
    %v1783 = vunpack.c.h.b16 %v1459
    %v1784 = vunpack.c.l.b16 %v1460
    %v1785 = vunpack.c.h.b16 %v1460
    %v1786 = vunpack.c.l.b16 %v1461
    %v1787 = vunpack.c.h.b16 %v1461
    %v1788 = vunpack.c.l.b16 %v1462
    %v1789 = vunpack.c.h.b16 %v1462
    %v1790 = vunpack.c.l.b16 %v1463
    %v1791 = vunpack.c.h.b16 %v1463
    %v1792 = vunpack.c.l.b16 %v1464
    %v1793 = vunpack.c.h.b16 %v1464
    %v1794 = vunpack.c.l.b16 %v1465
    %v1795 = vunpack.c.h.b16 %v1465
    %v1796 = vunpack.c.l.b16 %v1466
    %v1797 = vunpack.c.h.b16 %v1466
    %v1798 = vunpack.c.l.b16 %v1467
    %v1799 = vunpack.c.h.b16 %v1467
    %v1800 = vunpack.c.l.b16 %v1468
    %v1801 = vunpack.c.h.b16 %v1468
    %v1802 = vunpack.c.l.b16 %v1469
    %v1803 = vunpack.c.h.b16 %v1469
    %v1804 = vunpack.c.l.b16 %v1470
    %v1805 = vunpack.c.h.b16 %v1470
    %v1806 = vunpack.c.l.b16 %v1471
    %v1807 = vunpack.c.h.b16 %v1471
    %v1808 = vunpack.c.l.b16 %v1472
    %v1809 = vunpack.c.h.b16 %v1472
    %v1810 = vunpack.c.l.b16 %v1473
    %v1811 = vunpack.c.h.b16 %v1473
    %v1812 = vunpack.c.l.b16 %v1474
    %v1813 = vunpack.c.h.b16 %v1474
    %v1814 = vunpack.c.l.b16 %v1475
    %v1815 = vunpack.c.h.b16 %v1475
    %v1816 = vunpack.c.l.b16 %v1476
    %v1817 = vunpack.c.h.b16 %v1476
    %v1818 = vunpack.c.l.b16 %v1477
    %v1819 = vunpack.c.h.b16 %v1477
    %v1820 = vunpack.c.l.b16 %v1478
    %v1821 = vunpack.c.h.b16 %v1478
    %v1822 = vunpack.c.l.b16 %v1479
    %v1823 = vunpack.c.h.b16 %v1479
    %v1824 = vunpack.c.l.b16 %v1480
    %v1825 = vunpack.c.h.b16 %v1480
    %v1826 = vunpack.c.l.b16 %v1481
    %v1827 = vunpack.c.h.b16 %v1481
    %v1828 = vunpack.c.l.b16 %v1482
    %v1829 = vunpack.c.h.b16 %v1482
    %v1830 = vunpack.c.l.b16 %v1483
    %v1831 = vunpack.c.h.b16 %v1483
    %v1832 = vunpack.c.l.b16 %v1484
    %v1833 = vunpack.c.h.b16 %v1484
    %v1834 = vunpack.c.l.b16 %v1485
    %v1835 = vunpack.c.h.b16 %v1485
    %v1836 = vunpack.c.l.b16 %v1486
    %v1837 = vunpack.c.h.b16 %v1486
    %v1838 = vunpack.c.l.b16 %v1487
    %v1839 = vunpack.c.h.b16 %v1487
    %v1840 = vunpack.c.l.b16 %v1488
    %v1841 = vunpack.c.h.b16 %v1488
    %v1842 = vunpack.c.l.b16 %v1489
    %v1843 = vunpack.c.h.b16 %v1489
    %v1844 = vunpack.c.l.b16 %v1490
    %v1845 = vunpack.c.h.b16 %v1490
    %v1846 = vunpack.c.l.b16 %v1491
    %v1847 = vunpack.c.h.b16 %v1491
    %v1848 = vunpack.c.l.b16 %v1492
    %v1849 = vunpack.c.h.b16 %v1492
    %v1850 = vunpack.c.l.b16 %v1493
    %v1851 = vunpack.c.h.b16 %v1493
    %v1852 = vunpack.c.l.b16 %v1494
    %v1853 = vunpack.c.h.b16 %v1494
    %v1854 = vunpack.c.l.b16 %v1495
    %v1855 = vunpack.c.h.b16 %v1495
    %v1856 = vunpack.c.l.b16 %v1496
    %v1857 = vunpack.c.h.b16 %v1496
    %v1858 = vunpack.c.l.b16 %v1497
    %v1859 = vunpack.c.h.b16 %v1497
    %v1860 = vunpack.c.l.b16 %v1498
    %v1861 = vunpack.c.h.b16 %v1498
    %v1862 = vunpack.c.l.b16 %v1499
    %v1863 = vunpack.c.h.b16 %v1499
    %v1864 = vunpack.c.l.b16 %v1500
    %v1865 = vunpack.c.h.b16 %v1500
    %v1866 = vunpack.c.l.b16 %v1501
    %v1867 = vunpack.c.h.b16 %v1501
    %v1868 = vunpack.c.l.b16 %v1502
    %v1869 = vunpack.c.h.b16 %v1502
    %v1870 = vunpack.c.l.b16 %v1503
    %v1871 = vunpack.c.h.b16 %v1503
    %v1872 = vunpack.c.l.b16 %v1504
    %v1873 = vunpack.c.h.b16 %v1504
    %v1874 = vunpack.c.l.b16 %v1505
    %v1875 = vunpack.c.h.b16 %v1505
    %v1876 = vunpack.c.l.b16 %v1506
    %v1877 = vunpack.c.h.b16 %v1506
    %v1878 = vunpack.c.l.b16 %v1507
    %v1879 = vunpack.c.h.b16 %v1507
    %v1880 = vunpack.c.l.b16 %v1508
    %v1881 = vunpack.c.h.b16 %v1508
    %v1882 = vunpack.c.l.b16 %v1509
    %v1883 = vunpack.c.h.b16 %v1509
    %v1884 = vunpack.c.l.b16 %v1510
    %v1885 = vunpack.c.h.b16 %v1510
    %v1886 = vunpack.c.l.b16 %v1511
    %v1887 = vunpack.c.h.b16 %v1511
    %v1888 = vunpack.c.l.b16 %v1512
    %v1889 = vunpack.c.h.b16 %v1512
    %v1890 = vunpack.c.l.b16 %v1513
    %v1891 = vunpack.c.h.b16 %v1513
    %v1892 = vunpack.c.l.b16 %v1514
    %v1893 = vunpack.c.h.b16 %v1514
    %v1894 = vunpack.c.l.b16 %v1515
    %v1895 = vunpack.c.h.b16 %v1515
    %v1896 = vunpack.c.l.b16 %v1516
    %v1897 = vunpack.c.h.b16 %v1516
    %v1898 = vunpack.c.l.b16 %v1517
    %v1899 = vunpack.c.h.b16 %v1517
    %v1900 = vunpack.c.l.b16 %v1518
    %v1901 = vunpack.c.h.b16 %v1518
    %v1902 = vunpack.c.l.b16 %v1519
    %v1903 = vunpack.c.h.b16 %v1519
    %v1904 = vunpack.c.l.b16 %v1520
    %v1905 = vunpack.c.h.b16 %v1520
    %v1906 = vunpack.c.l.b16 %v1521
    %v1907 = vunpack.c.h.b16 %v1521
    %v1908 = vunpack.c.l.b16 %v1522
    %v1909 = vunpack.c.h.b16 %v1522
    %v1910 = vunpack.c.l.b16 %v1523
    %v1911 = vunpack.c.h.b16 %v1523
    %v1912 = vunpack.c.l.b16 %v1524
    %v1913 = vunpack.c.h.b16 %v1524
    %v1914 = vunpack.c.l.b16 %v1525
    %v1915 = vunpack.c.h.b16 %v1525
    %v1916 = vunpack.c.l.b16 %v1526
    %v1917 = vunpack.c.h.b16 %v1526
    %v1918 = vunpack.c.l.b16 %v1527
    %v1919 = vunpack.c.h.b16 %v1527
    %v1920 = vunpack.c.l.b16 %v1528
    %v1921 = vunpack.c.h.b16 %v1528
    %v1922 = vunpack.c.l.b16 %v1529
    %v1923 = vunpack.c.h.b16 %v1529
    %v1924 = vpack.c.b16 %v1672, %v1668
    %v1925 = vpack.c.b16 %v1673, %v1669
    %v1926 = vpack.c.b16 %v1674, %v1670
    %v1927 = vpack.c.b16 %v1675, %v1671
    %v1928 = vpack.c.b16 %v1680, %v1676
    %v1929 = vpack.c.b16 %v1681, %v1677
    %v1930 = vpack.c.b16 %v1682, %v1678
    %v1931 = vpack.c.b16 %v1683, %v1679
    %v1932 = vpack.c.b16 %v1688, %v1684
    %v1933 = vpack.c.b16 %v1689, %v1685
    %v1934 = vpack.c.b16 %v1690, %v1686
    %v1935 = vpack.c.b16 %v1691, %v1687
    %v1936 = vpack.c.b16 %v1696, %v1692
    %v1937 = vpack.c.b16 %v1697, %v1693
    %v1938 = vpack.c.b16 %v1698, %v1694
    %v1939 = vpack.c.b16 %v1699, %v1695
    %v1940 = vpack.c.b16 %v1704, %v1700
    %v1941 = vpack.c.b16 %v1705, %v1701
    %v1942 = vpack.c.b16 %v1706, %v1702
    %v1943 = vpack.c.b16 %v1707, %v1703
    %v1944 = vpack.c.b16 %v1712, %v1708
    %v1945 = vpack.c.b16 %v1713, %v1709
    %v1946 = vpack.c.b16 %v1714, %v1710
    %v1947 = vpack.c.b16 %v1715, %v1711
    %v1948 = vpack.c.b16 %v1720, %v1716
    %v1949 = vpack.c.b16 %v1721, %v1717
    %v1950 = vpack.c.b16 %v1722, %v1718
    %v1951 = vpack.c.b16 %v1723, %v1719
    %v1952 = vpack.c.b16 %v1728, %v1724
    %v1953 = vpack.c.b16 %v1729, %v1725
    %v1954 = vpack.c.b16 %v1730, %v1726
    %v1955 = vpack.c.b16 %v1731, %v1727
    %v1956 = vpack.c.b16 %v1736, %v1732
    %v1957 = vpack.c.b16 %v1737, %v1733
    %v1958 = vpack.c.b16 %v1738, %v1734
    %v1959 = vpack.c.b16 %v1739, %v1735
    %v1960 = vpack.c.b16 %v1744, %v1740
    %v1961 = vpack.c.b16 %v1745, %v1741
    %v1962 = vpack.c.b16 %v1746, %v1742
    %v1963 = vpack.c.b16 %v1747, %v1743
    %v1964 = vpack.c.b16 %v1752, %v1748
    %v1965 = vpack.c.b16 %v1753, %v1749
    %v1966 = vpack.c.b16 %v1754, %v1750
    %v1967 = vpack.c.b16 %v1755, %v1751
    %v1968 = vpack.c.b16 %v1760, %v1756
    %v1969 = vpack.c.b16 %v1761, %v1757
    %v1970 = vpack.c.b16 %v1762, %v1758
    %v1971 = vpack.c.b16 %v1763, %v1759
    %v1972 = vpack.c.b16 %v1768, %v1764
    %v1973 = vpack.c.b16 %v1769, %v1765
    %v1974 = vpack.c.b16 %v1770, %v1766
    %v1975 = vpack.c.b16 %v1771, %v1767
    %v1976 = vpack.c.b16 %v1776, %v1772
    %v1977 = vpack.c.b16 %v1777, %v1773
    %v1978 = vpack.c.b16 %v1778, %v1774
    %v1979 = vpack.c.b16 %v1779, %v1775
    %v1980 = vpack.c.b16 %v1784, %v1780
    %v1981 = vpack.c.b16 %v1785, %v1781
    %v1982 = vpack.c.b16 %v1786, %v1782
    %v1983 = vpack.c.b16 %v1787, %v1783
    %v1984 = vpack.c.b16 %v1792, %v1788
    %v1985 = vpack.c.b16 %v1793, %v1789
    %v1986 = vpack.c.b16 %v1794, %v1790
    %v1987 = vpack.c.b16 %v1795, %v1791
    %v1988 = vpack.c.b16 %v1800, %v1796
    %v1989 = vpack.c.b16 %v1801, %v1797
    %v1990 = vpack.c.b16 %v1802, %v1798
    %v1991 = vpack.c.b16 %v1803, %v1799
    %v1992 = vpack.c.b16 %v1808, %v1804
    %v1993 = vpack.c.b16 %v1809, %v1805
    %v1994 = vpack.c.b16 %v1810, %v1806
    %v1995 = vpack.c.b16 %v1811, %v1807
    %v1996 = vpack.c.b16 %v1816, %v1812
    %v1997 = vpack.c.b16 %v1817, %v1813
    %v1998 = vpack.c.b16 %v1818, %v1814
    %v1999 = vpack.c.b16 %v1819, %v1815
    %v2000 = vpack.c.b16 %v1824, %v1820
    %v2001 = vpack.c.b16 %v1825, %v1821
    %v2002 = vpack.c.b16 %v1826, %v1822
    %v2003 = vpack.c.b16 %v1827, %v1823
    %v2004 = vpack.c.b16 %v1832, %v1828
    %v2005 = vpack.c.b16 %v1833, %v1829
    %v2006 = vpack.c.b16 %v1834, %v1830
    %v2007 = vpack.c.b16 %v1835, %v1831
    %v2008 = vpack.c.b16 %v1840, %v1836
    %v2009 = vpack.c.b16 %v1841, %v1837
    %v2010 = vpack.c.b16 %v1842, %v1838
    %v2011 = vpack.c.b16 %v1843, %v1839
    %v2012 = vpack.c.b16 %v1848, %v1844
    %v2013 = vpack.c.b16 %v1849, %v1845
    %v2014 = vpack.c.b16 %v1850, %v1846
    %v2015 = vpack.c.b16 %v1851, %v1847
    %v2016 = vpack.c.b16 %v1856, %v1852
    %v2017 = vpack.c.b16 %v1857, %v1853
    %v2018 = vpack.c.b16 %v1858, %v1854
    %v2019 = vpack.c.b16 %v1859, %v1855
    %v2020 = vpack.c.b16 %v1864, %v1860
    %v2021 = vpack.c.b16 %v1865, %v1861
    %v2022 = vpack.c.b16 %v1866, %v1862
    %v2023 = vpack.c.b16 %v1867, %v1863
    %v2024 = vpack.c.b16 %v1872, %v1868
    %v2025 = vpack.c.b16 %v1873, %v1869
    %v2026 = vpack.c.b16 %v1874, %v1870
    %v2027 = vpack.c.b16 %v1875, %v1871
    %v2028 = vpack.c.b16 %v1880, %v1876
    %v2029 = vpack.c.b16 %v1881, %v1877
    %v2030 = vpack.c.b16 %v1882, %v1878
    %v2031 = vpack.c.b16 %v1883, %v1879
    %v2032 = vpack.c.b16 %v1888, %v1884
    %v2033 = vpack.c.b16 %v1889, %v1885
    %v2034 = vpack.c.b16 %v1890, %v1886
    %v2035 = vpack.c.b16 %v1891, %v1887
    %v2036 = vpack.c.b16 %v1896, %v1892
    %v2037 = vpack.c.b16 %v1897, %v1893
    %v2038 = vpack.c.b16 %v1898, %v1894
    %v2039 = vpack.c.b16 %v1899, %v1895
    %v2040 = vpack.c.b16 %v1904, %v1900
    %v2041 = vpack.c.b16 %v1905, %v1901
    %v2042 = vpack.c.b16 %v1906, %v1902
    %v2043 = vpack.c.b16 %v1907, %v1903
    %v2044 = vpack.c.b16 %v1912, %v1908
    %v2045 = vpack.c.b16 %v1913, %v1909
    %v2046 = vpack.c.b16 %v1914, %v1910
    %v2047 = vpack.c.b16 %v1915, %v1911
    %v2048 = vpack.c.b16 %v1920, %v1916
    %v2049 = vpack.c.b16 %v1921, %v1917
    %v2050 = vpack.c.b16 %v1922, %v1918
    %v2051 = vpack.c.b16 %v1923, %v1919
    %2180 = vmatpush.bf16.msra.mxu0 %v1952
    %2181 = vmatpush.bf16.msra.mxu0 %v1948
    %2182 = vmatpush.bf16.msra.mxu0 %v1944
    %2183 = vmatpush.bf16.msra.mxu0 %v1940
    %2184 = vmatpush.bf16.msra.mxu0 %v1936
    %2185 = vmatpush.bf16.msra.mxu0 %v1932
    %2186 = vmatpush.bf16.msra.mxu0 %v1928
    %2187 = vmatpush.bf16.msra.mxu0 %v1924
    %2188 = vmatmul.bf16.gmra.mxu0 %v1398
    %v2189 = vpop.f32.mrf.mxu0
    %v2190 = vadd.f32 %v1532, %v2189
    %v2191 = vpop.f32.mrf.mxu0
    %v2192 = vadd.f32 %v1532, %v2191
    %2193 = vdwg.mxu0
    %2194 = vmatpush.bf16.msra.mxu0 %v1984
    %2195 = vmatpush.bf16.msra.mxu0 %v1980
    %2196 = vmatpush.bf16.msra.mxu0 %v1976
    %2197 = vmatpush.bf16.msra.mxu0 %v1972
    %2198 = vmatpush.bf16.msra.mxu0 %v1968
    %2199 = vmatpush.bf16.msra.mxu0 %v1964
    %2200 = vmatpush.bf16.msra.mxu0 %v1960
    %2201 = vmatpush.bf16.msra.mxu0 %v1956
    %2202 = vmatmul.bf16.gmra.mxu0 %v1399
    %v2203 = vpop.f32.mrf.mxu0
    %v2204 = vadd.f32 %v2190, %v2203
    %v2205 = vpop.f32.mrf.mxu0
    %v2206 = vadd.f32 %v2192, %v2205
    %2207 = vdwg.mxu0
    %2208 = vmatpush.bf16.msra.mxu0 %v2016
    %2209 = vmatpush.bf16.msra.mxu0 %v2012
    %2210 = vmatpush.bf16.msra.mxu0 %v2008
    %2211 = vmatpush.bf16.msra.mxu0 %v2004
    %2212 = vmatpush.bf16.msra.mxu0 %v2000
    %2213 = vmatpush.bf16.msra.mxu0 %v1996
    %2214 = vmatpush.bf16.msra.mxu0 %v1992
    %2215 = vmatpush.bf16.msra.mxu0 %v1988
    %2216 = vmatmul.bf16.gmra.mxu0 %v1400
    %v2217 = vpop.f32.mrf.mxu0
    %v2218 = vadd.f32 %v2204, %v2217
    %v2219 = vpop.f32.mrf.mxu0
    %v2220 = vadd.f32 %v2206, %v2219
    %2221 = vdwg.mxu0
    %2222 = vmatpush.bf16.msra.mxu0 %v2048
    %2223 = vmatpush.bf16.msra.mxu0 %v2044
    %2224 = vmatpush.bf16.msra.mxu0 %v2040
    %2225 = vmatpush.bf16.msra.mxu0 %v2036
    %2226 = vmatpush.bf16.msra.mxu0 %v2032
    %2227 = vmatpush.bf16.msra.mxu0 %v2028
    %2228 = vmatpush.bf16.msra.mxu0 %v2024
    %2229 = vmatpush.bf16.msra.mxu0 %v2020
    %2230 = vmatmul.bf16.gmra.mxu0 %v1401
    %v2231 = vpop.f32.mrf.mxu0
    %v2232 = vadd.f32 %v2218, %v2231
    %v2233 = vpop.f32.mrf.mxu0
    %v2234 = vadd.f32 %v2220, %v2233
    %2235 = vdwg.mxu0
    %2236 = vmatpush.bf16.msra.mxu0 %v1953
    %2237 = vmatpush.bf16.msra.mxu0 %v1949
    %2238 = vmatpush.bf16.msra.mxu0 %v1945
    %2239 = vmatpush.bf16.msra.mxu0 %v1941
    %2240 = vmatpush.bf16.msra.mxu0 %v1937
    %2241 = vmatpush.bf16.msra.mxu0 %v1933
    %2242 = vmatpush.bf16.msra.mxu0 %v1929
    %2243 = vmatpush.bf16.msra.mxu0 %v1925
    %2244 = vmatmul.bf16.gmra.mxu0 %v1398
    %v2245 = vpop.f32.mrf.mxu0
    %v2246 = vadd.f32 %v1533, %v2245
    %v2247 = vpop.f32.mrf.mxu0
    %v2248 = vadd.f32 %v1533, %v2247
    %2249 = vdwg.mxu0
    %2250 = vmatpush.bf16.msra.mxu0 %v1985
    %2251 = vmatpush.bf16.msra.mxu0 %v1981
    %2252 = vmatpush.bf16.msra.mxu0 %v1977
    %2253 = vmatpush.bf16.msra.mxu0 %v1973
    %2254 = vmatpush.bf16.msra.mxu0 %v1969
    %2255 = vmatpush.bf16.msra.mxu0 %v1965
    %2256 = vmatpush.bf16.msra.mxu0 %v1961
    %2257 = vmatpush.bf16.msra.mxu0 %v1957
    %2258 = vmatmul.bf16.gmra.mxu0 %v1399
    %v2259 = vpop.f32.mrf.mxu0
    %v2260 = vadd.f32 %v2246, %v2259
    %v2261 = vpop.f32.mrf.mxu0
    %v2262 = vadd.f32 %v2248, %v2261
    %2263 = vdwg.mxu0
    %2264 = vmatpush.bf16.msra.mxu0 %v2017
    %2265 = vmatpush.bf16.msra.mxu0 %v2013
    %2266 = vmatpush.bf16.msra.mxu0 %v2009
    %2267 = vmatpush.bf16.msra.mxu0 %v2005
    %2268 = vmatpush.bf16.msra.mxu0 %v2001
    %2269 = vmatpush.bf16.msra.mxu0 %v1997
    %2270 = vmatpush.bf16.msra.mxu0 %v1993
    %2271 = vmatpush.bf16.msra.mxu0 %v1989
    %2272 = vmatmul.bf16.gmra.mxu0 %v1400
    %v2273 = vpop.f32.mrf.mxu0
    %v2274 = vadd.f32 %v2260, %v2273
    %v2275 = vpop.f32.mrf.mxu0
    %v2276 = vadd.f32 %v2262, %v2275
    %2277 = vdwg.mxu0
    %2278 = vmatpush.bf16.msra.mxu0 %v2049
    %2279 = vmatpush.bf16.msra.mxu0 %v2045
    %2280 = vmatpush.bf16.msra.mxu0 %v2041
    %2281 = vmatpush.bf16.msra.mxu0 %v2037
    %2282 = vmatpush.bf16.msra.mxu0 %v2033
    %2283 = vmatpush.bf16.msra.mxu0 %v2029
    %2284 = vmatpush.bf16.msra.mxu0 %v2025
    %2285 = vmatpush.bf16.msra.mxu0 %v2021
    %2286 = vmatmul.bf16.gmra.mxu0 %v1401
    %v2287 = vpop.f32.mrf.mxu0
    %v2288 = vadd.f32 %v2274, %v2287
    %v2289 = vpop.f32.mrf.mxu0
    %v2290 = vadd.f32 %v2276, %v2289
    %2291 = vdwg.mxu0
    %2292 = vmatpush.bf16.msra.mxu0 %v1954
    %2293 = vmatpush.bf16.msra.mxu0 %v1950
    %2294 = vmatpush.bf16.msra.mxu0 %v1946
    %2295 = vmatpush.bf16.msra.mxu0 %v1942
    %2296 = vmatpush.bf16.msra.mxu0 %v1938
    %2297 = vmatpush.bf16.msra.mxu0 %v1934
    %2298 = vmatpush.bf16.msra.mxu0 %v1930
    %2299 = vmatpush.bf16.msra.mxu0 %v1926
    %2300 = vmatmul.bf16.gmra.mxu0 %v1398
    %v2301 = vpop.f32.mrf.mxu0
    %v2302 = vadd.f32 %v1534, %v2301
    %v2303 = vpop.f32.mrf.mxu0
    %v2304 = vadd.f32 %v1534, %v2303
    %2305 = vdwg.mxu0
    %2306 = vmatpush.bf16.msra.mxu0 %v1986
    %2307 = vmatpush.bf16.msra.mxu0 %v1982
    %2308 = vmatpush.bf16.msra.mxu0 %v1978
    %2309 = vmatpush.bf16.msra.mxu0 %v1974
    %2310 = vmatpush.bf16.msra.mxu0 %v1970
    %2311 = vmatpush.bf16.msra.mxu0 %v1966
    %2312 = vmatpush.bf16.msra.mxu0 %v1962
    %2313 = vmatpush.bf16.msra.mxu0 %v1958
    %2314 = vmatmul.bf16.gmra.mxu0 %v1399
    %v2315 = vpop.f32.mrf.mxu0
    %v2316 = vadd.f32 %v2302, %v2315
    %v2317 = vpop.f32.mrf.mxu0
    %v2318 = vadd.f32 %v2304, %v2317
    %2319 = vdwg.mxu0
    %2320 = vmatpush.bf16.msra.mxu0 %v2018
    %2321 = vmatpush.bf16.msra.mxu0 %v2014
    %2322 = vmatpush.bf16.msra.mxu0 %v2010
    %2323 = vmatpush.bf16.msra.mxu0 %v2006
    %2324 = vmatpush.bf16.msra.mxu0 %v2002
    %2325 = vmatpush.bf16.msra.mxu0 %v1998
    %2326 = vmatpush.bf16.msra.mxu0 %v1994
    %2327 = vmatpush.bf16.msra.mxu0 %v1990
    %2328 = vmatmul.bf16.gmra.mxu0 %v1400
    %v2329 = vpop.f32.mrf.mxu0
    %v2330 = vadd.f32 %v2316, %v2329
    %v2331 = vpop.f32.mrf.mxu0
    %v2332 = vadd.f32 %v2318, %v2331
    %2333 = vdwg.mxu0
    %2334 = vmatpush.bf16.msra.mxu0 %v2050
    %2335 = vmatpush.bf16.msra.mxu0 %v2046
    %2336 = vmatpush.bf16.msra.mxu0 %v2042
    %2337 = vmatpush.bf16.msra.mxu0 %v2038
    %2338 = vmatpush.bf16.msra.mxu0 %v2034
    %2339 = vmatpush.bf16.msra.mxu0 %v2030
    %2340 = vmatpush.bf16.msra.mxu0 %v2026
    %2341 = vmatpush.bf16.msra.mxu0 %v2022
    %2342 = vmatmul.bf16.gmra.mxu0 %v1401
    %v2343 = vpop.f32.mrf.mxu0
    %v2344 = vadd.f32 %v2330, %v2343
    %v2345 = vpop.f32.mrf.mxu0
    %v2346 = vadd.f32 %v2332, %v2345
    %2347 = vdwg.mxu0
    %2348 = vmatpush.bf16.msra.mxu0 %v1955
    %2349 = vmatpush.bf16.msra.mxu0 %v1951
    %2350 = vmatpush.bf16.msra.mxu0 %v1947
    %2351 = vmatpush.bf16.msra.mxu0 %v1943
    %2352 = vmatpush.bf16.msra.mxu0 %v1939
    %2353 = vmatpush.bf16.msra.mxu0 %v1935
    %2354 = vmatpush.bf16.msra.mxu0 %v1931
    %2355 = vmatpush.bf16.msra.mxu0 %v1927
    %2356 = vmatmul.bf16.gmra.mxu0 %v1398
    %v2357 = vpop.f32.mrf.mxu0
    %v2358 = vadd.f32 %v1535, %v2357
    %v2359 = vpop.f32.mrf.mxu0
    %v2360 = vadd.f32 %v1535, %v2359
    %2361 = vdwg.mxu0
    %2362 = vmatpush.bf16.msra.mxu0 %v1987
    %2363 = vmatpush.bf16.msra.mxu0 %v1983
    %2364 = vmatpush.bf16.msra.mxu0 %v1979
    %2365 = vmatpush.bf16.msra.mxu0 %v1975
    %2366 = vmatpush.bf16.msra.mxu0 %v1971
    %2367 = vmatpush.bf16.msra.mxu0 %v1967
    %2368 = vmatpush.bf16.msra.mxu0 %v1963
    %2369 = vmatpush.bf16.msra.mxu0 %v1959
    %2370 = vmatmul.bf16.gmra.mxu0 %v1399
    %v2371 = vpop.f32.mrf.mxu0
    %v2372 = vadd.f32 %v2358, %v2371
    %v2373 = vpop.f32.mrf.mxu0
    %v2374 = vadd.f32 %v2360, %v2373
    %2375 = vdwg.mxu0
    %2376 = vmatpush.bf16.msra.mxu0 %v2019
    %2377 = vmatpush.bf16.msra.mxu0 %v2015
    %2378 = vmatpush.bf16.msra.mxu0 %v2011
    %2379 = vmatpush.bf16.msra.mxu0 %v2007
    %2380 = vmatpush.bf16.msra.mxu0 %v2003
    %2381 = vmatpush.bf16.msra.mxu0 %v1999
    %2382 = vmatpush.bf16.msra.mxu0 %v1995
    %2383 = vmatpush.bf16.msra.mxu0 %v1991
    %2384 = vmatmul.bf16.gmra.mxu0 %v1400
    %v2385 = vpop.f32.mrf.mxu0
    %v2386 = vadd.f32 %v2372, %v2385
    %v2387 = vpop.f32.mrf.mxu0
    %v2388 = vadd.f32 %v2374, %v2387
    %2389 = vdwg.mxu0
    %2390 = vmatpush.bf16.msra.mxu0 %v2051
    %2391 = vmatpush.bf16.msra.mxu0 %v2047
    %2392 = vmatpush.bf16.msra.mxu0 %v2043
    %2393 = vmatpush.bf16.msra.mxu0 %v2039
    %2394 = vmatpush.bf16.msra.mxu0 %v2035
    %2395 = vmatpush.bf16.msra.mxu0 %v2031
    %2396 = vmatpush.bf16.msra.mxu0 %v2027
    %2397 = vmatpush.bf16.msra.mxu0 %v2023
    %2398 = vmatmul.bf16.gmra.mxu0 %v1401
    %v2399 = vpop.f32.mrf.mxu0
    %v2400 = vadd.f32 %v2386, %v2399
    %v2401 = vpop.f32.mrf.mxu0
    %v2402 = vadd.f32 %v2388, %v2401
    %2403 = vdwg.mxu0
    %v2404 = vmax.f32 %v2232, 0.0
    %v2405 = vmax.f32 %v2288, 0.0
    %v2406 = vmax.f32 %v2344, 0.0
    %v2407 = vmax.f32 %v2400, 0.0
    %v2408 = vmax.f32 %v2234, 0.0
    %v2409 = vmax.f32 %v2290, 0.0
    %v2410 = vmax.f32 %v2346, 0.0
    %v2411 = vmax.f32 %v2402, 0.0
    %v2412 = vld [vmem:[#allocation11] sm:$0xf]
    %v2414 = vperm.slane %v2412, 0
    %v2415 = vperm.slane %v2412, 1
    %v2416 = vperm.slane %v2412, 2
    %v2417 = vperm.slane %v2412, 3
    %v2422 = vmul.f32 %v2404, %v2414
    %v2423 = vmul.f32 %v2405, %v2415
    %v2424 = vmul.f32 %v2406, %v2416
    %v2425 = vmul.f32 %v2407, %v2417
    %v2426 = vmul.f32 %v2408, %v2414
    %v2427 = vmul.f32 %v2409, %v2415
    %v2428 = vmul.f32 %v2410, %v2416
    %v2429 = vmul.f32 %v2411, %v2417
    %v2430 = vadd.f32 %v2422, %v2423
    %v2431 = vadd.f32 %v2430, %v2424
    %v2432 = vadd.f32 %v2431, %v2425
    %2433 = vadd.xlane.f32.xlu0 %v2432
    %v2434 = vpop.xlane.xlu0 %2433
    %v2435 = vadd.f32 %v2426, %v2427
    %v2436 = vadd.f32 %v2435, %v2428
    %v2437 = vadd.f32 %v2436, %v2429
    %2438 = vadd.xlane.f32.xlu0 %v2437
    %v2439 = vpop.xlane.xlu0 %2438
    %s2440 = sld [smem:[#allocation2]]
    %v2441 = vstv %s2440
    %v2442 = vadd.f32 %v2434, %v2441
    %v2443 = vadd.f32 %v2439, %v2441
    %vm2444 = vcmask 7168
    %2445 = vst.msk [vmem:[%s8] sm:$0xff] %vm2444, %v2442
    %2446 = vst.msk [vmem:[%s8 + $0x8] sm:$0xff] %vm2444, %v2443
    // Predicated region
    $region58: #{tpu_custom_call.1} parent=1 // pred_check
      _
    $region59: #{tpu_custom_call.1} parent=1 // pred_check_branch
      %2448 = sbr.rel (0) target = $region61
    $region60: #{tpu_custom_call.1} parent=1 // pred_region
      _
    $region61: #{tpu_custom_call.1} parent=1 // pred_fallthru
      _
    // Predicated region
    $region62: #{tpu_custom_call.1} parent=1 // pred_check
      _
    $region63: #{tpu_custom_call.1} parent=1 // pred_check_branch
      %2450 = sbr.rel (0) target = $region65
    $region64: #{tpu_custom_call.1} parent=1 // pred_region
      _
    $region65: #{tpu_custom_call.1} parent=1 // pred_fallthru
      _
    %2451 = vsyncpa [#allocation4], 1
    %2452 = vsyncpa [#allocation6], 1
    %2453 = vsyncpa [#allocation9], 1
    %2454 = vsyncpa [#allocation12], 1

</llo_original>
